<compile_context>
chip_gen: v6e
topology: v6e:2x2x1
jax: 0.10.0
libtpu: 0.0.40
codegen_flags: <defaults>
</compile_context>

<pallas_src>
import functools

import jax
import jax.numpy as jnp
from jax.experimental import pallas as pl
from jax.experimental.pallas import tpu as pltpu


def _mlp_kernel(x_ref, w_in_ref, b_in_ref, w_hid_ref, b_hid_ref,
                w_out_ref, b_out_ref, o_ref, *, num_hidden):
    # x_ref: (3, TM) tile of collocation points, batch on the lane axis.
    x = x_ref[...]            # (3, TM)
    w_in = w_in_ref[...]      # (H, 3)  (PyTorch Linear layout: (out, in))

    # Input layer as three VPU broadcast FMAs instead of a K=3 MXU matmul
    # (EUP/tanh is the binding unit here, so these are hidden filler):
    #   h[o, n] = sum_f w_in[o, f] * x[f, n] + b_in[o]
    h = (w_in[:, 0:1] * x[0:1, :]
         + w_in[:, 1:2] * x[1:2, :]
         + w_in[:, 2:3] * x[2:3, :]
         + b_in_ref[...])     # (H, TM)
    h = jnp.tanh(h)

    # Hidden layers: stacked weights (L, H, H) as (out, in); biases (L, H, 1).
    # Static unroll is fine for shallow PINN stacks (L=2 here); switch to
    # lax.fori_loop with dynamic w_hid_ref[l] indexing only for L >> 4 to
    # bound vreg live ranges.
    for l in range(num_hidden):
        h = jnp.tanh(
            jnp.dot(w_hid_ref[l], h, preferred_element_type=jnp.float32)
            + b_hid_ref[l]
        )

    # Output layer: (1, H) @ (H, TM) + (1, 1) -> lane-dense (1, TM) store.
    o_ref[...] = (
        jnp.dot(w_out_ref[...], h, preferred_element_type=jnp.float32)
        + b_out_ref[...]
    ).astype(o_ref.dtype)


def _round_up(x, m):
    return ((x + m - 1) // m) * m


def _choose_tile_m(n, *, max_tile=8192, lane=128):
    """Pick a lane-aligned tile: big enough to amortize per-grid-step overhead,
    small enough to keep >= 2 (ideally even, for v7x's 2 TCs) balanced tiles."""
    n_tiles = max(2, pl.cdiv(n, max_tile))
    if n_tiles % 2:
        n_tiles += 1           # even tile count balances the two v7x TensorCores
    return min(max_tile, max(lane, _round_up(pl.cdiv(n, n_tiles), lane)))


def pinn_forward(X, params, *, tile_m=None):
    """Pallas implementation of PINN_2D_AcousticWave.forward.

    X: (N, 3) float32 collocation points. Returns (N,) float32 (torch .flatten()).
    """
    w_in, b_in, w_hid, b_hid, w_out, b_out = params
    N, F = X.shape
    assert F == 3
    H = w_in.shape[0]
    L = w_hid.shape[0]

    if tile_m is None:
        tile_m = _choose_tile_m(N)
    assert tile_m % 128 == 0, "tile_m must be lane-aligned (multiple of 128)"
    n_tiles = pl.cdiv(N, tile_m)
    n_pad = n_tiles * tile_m

    # Feature-major layout (batch on lanes), single fused pad->transpose pass.
    # In a training loop the collocation set is reused every iteration, so x_t
    # can be computed once outside the loop and persisted.
    x_t = jnp.pad(X, ((0, n_pad - N), (0, 0))).T if n_pad != N else X.T

    # Advisory cost estimate so XLA schedules surrounding ops sensibly.
    weight_bytes = 4 * int(w_in.size + b_in.size + w_hid.size
                           + b_hid.size + w_out.size + b_out.size)
    cost = pl.CostEstimate(
        flops=2 * n_pad * (3 * H + L * H * H + H),
        transcendentals=n_pad * (L + 1) * H,
        bytes_accessed=16 * n_pad + weight_bytes,   # 12 B/pt in + 4 B/pt out
    )

    kernel = functools.partial(_mlp_kernel, num_hidden=L)

    out = pl.pallas_call(
        kernel,
        out_shape=jax.ShapeDtypeStruct((1, n_pad), jnp.float32),
        grid_spec=pltpu.PrefetchScalarGridSpec(
            num_scalar_prefetch=0,
            grid=(n_tiles,),
            in_specs=[
                pl.BlockSpec((3, tile_m), lambda i: (0, i)),     # X tile (3, TM)
                pl.BlockSpec((H, 3), lambda i: (0, 0)),          # w_in
                pl.BlockSpec((H, 1), lambda i: (0, 0)),          # b_in
                pl.BlockSpec((L, H, H), lambda i: (0, 0, 0)),    # w_hid
                pl.BlockSpec((L, H, 1), lambda i: (0, 0, 0)),    # b_hid
                pl.BlockSpec((1, H), lambda i: (0, 0)),          # w_out
                pl.BlockSpec((1, 1), lambda i: (0, 0)),          # b_out
            ],
            out_specs=pl.BlockSpec((1, tile_m), lambda i: (0, i)),  # lane-dense
        ),
        compiler_params=pltpu.CompilerParams(
            dimension_semantics=("parallel",),   # shardable across v7x's 2 TCs
            vmem_limit_bytes=32 << 20,           # lift v5e's 16 MiB default cap
        ),
        cost_estimate=cost,
    )(x_t, w_in, b_in, w_hid, b_hid, w_out, b_out)

    return out.reshape(-1)[:N]   # torch .flatten(), drop padding


def init_params(key, hidden_layers, nodes_per_layer):
    """Deterministic synthetic parameters, PyTorch-Linear-style uniform init.

    Weights are stored (out, in) — the same layout as torch.nn.Linear.weight.
    """
    H = nodes_per_layer
    ks = jax.random.split(key, 6)

    def uni(k, shape, fan_in):
        bound = 1.0 / jnp.sqrt(fan_in)
        return jax.random.uniform(k, shape, jnp.float32, -bound, bound)

    w_in = uni(ks[0], (H, 3), 3.0)
    b_in = uni(ks[1], (H, 1), 3.0)
    w_hid = uni(ks[2], (hidden_layers, H, H), float(H))
    b_hid = uni(ks[3], (hidden_layers, H, 1), float(H))
    w_out = uni(ks[4], (1, H), float(H))
    b_out = uni(ks[5], (1, 1), float(H))
    return (w_in, b_in, w_hid, b_hid, w_out, b_out)


def _forward_ref(X, params):
    """Pure-JAX reference of the same forward pass (row-major form)."""
    w_in, b_in, w_hid, b_hid, w_out, b_out = params
    h = jnp.tanh(X @ w_in.T + b_in.reshape(1, -1))
    for l in range(w_hid.shape[0]):
        h = jnp.tanh(h @ w_hid[l].T + b_hid[l].reshape(1, -1))
    return (h @ w_out.T + b_out.reshape(1, -1)).reshape(-1)


if __name__ == "__main__":
    # Small shapes consistent with the module's forward: N collocation points,
    # 3 input features (t, x, z), hiddenLayers=2, nodesPerLayer=32.
    # N is deliberately NOT a multiple of the lane width to exercise padding;
    # the adaptive tile picker yields 2 balanced tiles here.
    N = 2500
    HIDDEN_LAYERS = 2
    NODES_PER_LAYER = 32

    key = jax.random.PRNGKey(0)
    k_x, k_p = jax.random.split(key)
    X = jax.random.uniform(k_x, (N, 3), jnp.float32, -1.0, 1.0)
    params = init_params(k_p, HIDDEN_LAYERS, NODES_PER_LAYER)

    u = pinn_forward(X, params)            # adaptive tile_m
    u = jax.block_until_ready(u)

    u_ref = _forward_ref(X, params)
    assert u.shape == (N,)
    assert jnp.allclose(u, u_ref, atol=2e-5, rtol=2e-5)

    # Also exercise an explicit large tile (single-tile fallback path).
    u2 = jax.block_until_ready(pinn_forward(X, params, tile_m=4096))
    assert jnp.allclose(u2, u_ref, atol=2e-5, rtol=2e-5)

    # TODO(synk): residual()/Adam_trainer/LBFGS_trainer use torch.autograd +
    # optimizers (training loop + PDE residual autodiff), outside the
    # forward-pass kernel scope.
    print("KERNEL_OK")
</pallas_src>

<mosaic_0001>
module attributes {stable_mosaic.version = 11 : i64} {
  func.func @_mlp_kernel(%arg0: i32, %arg1: memref<3x1280xf32, #tpu.memory_space<vmem>>, %arg2: memref<32x3xf32, #tpu.memory_space<vmem>>, %arg3: memref<32x1xf32, #tpu.memory_space<vmem>>, %arg4: memref<2x32x32xf32, #tpu.memory_space<vmem>>, %arg5: memref<2x32x1xf32, #tpu.memory_space<vmem>>, %arg6: memref<1x32xf32, #tpu.memory_space<vmem>>, %arg7: memref<1x1xf32, #tpu.memory_space<vmem>>, %arg8: memref<1x1280xf32, #tpu.memory_space<vmem>>) attributes {dimension_semantics = [#tpu.dimension_semantics<parallel>], iteration_bounds = array<i64: 2>, scalar_prefetch = 0 : i64, scratch_operands = 0 : i64, tpu.core_type = #tpu.core_type<tc>, window_params = [{transform_indices = @transform_0, window_bounds = array<i64: 3, 1280>}, {pipeline_mode = #tpu.pipeline_mode<synchronous>, transform_indices = @transform_1, window_bounds = array<i64: 32, 3>}, {pipeline_mode = #tpu.pipeline_mode<synchronous>, transform_indices = @transform_2, window_bounds = array<i64: 32, 1>}, {pipeline_mode = #tpu.pipeline_mode<synchronous>, transform_indices = @transform_3, window_bounds = array<i64: 2, 32, 32>}, {pipeline_mode = #tpu.pipeline_mode<synchronous>, transform_indices = @transform_4, window_bounds = array<i64: 2, 32, 1>}, {pipeline_mode = #tpu.pipeline_mode<synchronous>, transform_indices = @transform_5, window_bounds = array<i64: 1, 32>}, {pipeline_mode = #tpu.pipeline_mode<synchronous>, transform_indices = @transform_6, window_bounds = array<i64: 1, 1>}, {transform_indices = @transform_7, window_bounds = array<i64: 1, 1280>}]} {
    %c0 = arith.constant 0 : index
    %c0_0 = arith.constant 0 : index
    %0 = vector.load %arg1[%c0, %c0_0] : memref<3x1280xf32, #tpu.memory_space<vmem>>, vector<3x1280xf32>
    %c0_1 = arith.constant 0 : index
    %c0_2 = arith.constant 0 : index
    %1 = vector.load %arg2[%c0_1, %c0_2] : memref<32x3xf32, #tpu.memory_space<vmem>>, vector<32x3xf32>
    %2 = vector.extract_strided_slice %1 {offsets = [0, 0], sizes = [32, 1], strides = [1, 1]} : vector<32x3xf32> to vector<32x1xf32>
    %3 = vector.extract_strided_slice %0 {offsets = [0, 0], sizes = [1, 1280], strides = [1, 1]} : vector<3x1280xf32> to vector<1x1280xf32>
    %4 = vector.broadcast %2 : vector<32x1xf32> to vector<32x1280xf32>
    %5 = vector.broadcast %3 : vector<1x1280xf32> to vector<32x1280xf32>
    %6 = arith.mulf %4, %5 : vector<32x1280xf32>
    %7 = vector.extract_strided_slice %1 {offsets = [0, 1], sizes = [32, 1], strides = [1, 1]} : vector<32x3xf32> to vector<32x1xf32>
    %8 = vector.extract_strided_slice %0 {offsets = [1, 0], sizes = [1, 1280], strides = [1, 1]} : vector<3x1280xf32> to vector<1x1280xf32>
    %9 = vector.broadcast %7 : vector<32x1xf32> to vector<32x1280xf32>
    %10 = vector.broadcast %8 : vector<1x1280xf32> to vector<32x1280xf32>
    %11 = arith.mulf %9, %10 : vector<32x1280xf32>
    %12 = arith.addf %6, %11 : vector<32x1280xf32>
    %13 = vector.extract_strided_slice %1 {offsets = [0, 2], sizes = [32, 1], strides = [1, 1]} : vector<32x3xf32> to vector<32x1xf32>
    %14 = vector.extract_strided_slice %0 {offsets = [2, 0], sizes = [1, 1280], strides = [1, 1]} : vector<3x1280xf32> to vector<1x1280xf32>
    %15 = vector.broadcast %13 : vector<32x1xf32> to vector<32x1280xf32>
    %16 = vector.broadcast %14 : vector<1x1280xf32> to vector<32x1280xf32>
    %17 = arith.mulf %15, %16 : vector<32x1280xf32>
    %18 = arith.addf %12, %17 : vector<32x1280xf32>
    %c0_3 = arith.constant 0 : index
    %c0_4 = arith.constant 0 : index
    %19 = vector.load %arg3[%c0_3, %c0_4] : memref<32x1xf32, #tpu.memory_space<vmem>>, vector<32x1xf32>
    %20 = vector.broadcast %19 : vector<32x1xf32> to vector<32x1280xf32>
    %21 = arith.addf %18, %20 : vector<32x1280xf32>
    %22 = math.tanh %21 : vector<32x1280xf32>
    %c0_5 = arith.constant 0 : index
    %c0_6 = arith.constant 0 : index
    %c0_7 = arith.constant 0 : index
    %23 = vector.load %arg4[%c0_5, %c0_6, %c0_7] : memref<2x32x32xf32, #tpu.memory_space<vmem>>, vector<1x32x32xf32>
    %24 = vector.shape_cast %23 : vector<1x32x32xf32> to vector<32x32xf32>
    %cst = arith.constant dense<0.000000e+00> : vector<32x1280xf32>
    %25 = tpu.matmul %24, %22, %cst {dimension_numbers = #tpu.dot_dimension_numbers<[1], [0], [0], [1], [0, 0, 1, 1], [], []>} : vector<32x32xf32>, vector<32x1280xf32>, vector<32x1280xf32> -> vector<32x1280xf32>
    %c0_8 = arith.constant 0 : index
    %c0_9 = arith.constant 0 : index
    %c0_10 = arith.constant 0 : index
    %26 = vector.load %arg5[%c0_8, %c0_9, %c0_10] : memref<2x32x1xf32, #tpu.memory_space<vmem>>, vector<1x32x1xf32>
    %27 = vector.shape_cast %26 : vector<1x32x1xf32> to vector<32x1xf32>
    %28 = vector.broadcast %27 : vector<32x1xf32> to vector<32x1280xf32>
    %29 = arith.addf %25, %28 : vector<32x1280xf32>
    %30 = math.tanh %29 : vector<32x1280xf32>
    %c1 = arith.constant 1 : index
    %c0_11 = arith.constant 0 : index
    %c0_12 = arith.constant 0 : index
    %31 = vector.load %arg4[%c1, %c0_11, %c0_12] : memref<2x32x32xf32, #tpu.memory_space<vmem>>, vector<1x32x32xf32>
    %32 = vector.shape_cast %31 : vector<1x32x32xf32> to vector<32x32xf32>
    %cst_13 = arith.constant dense<0.000000e+00> : vector<32x1280xf32>
    %33 = tpu.matmul %32, %30, %cst_13 {dimension_numbers = #tpu.dot_dimension_numbers<[1], [0], [0], [1], [0, 0, 1, 1], [], []>} : vector<32x32xf32>, vector<32x1280xf32>, vector<32x1280xf32> -> vector<32x1280xf32>
    %c1_14 = arith.constant 1 : index
    %c0_15 = arith.constant 0 : index
    %c0_16 = arith.constant 0 : index
    %34 = vector.load %arg5[%c1_14, %c0_15, %c0_16] : memref<2x32x1xf32, #tpu.memory_space<vmem>>, vector<1x32x1xf32>
    %35 = vector.shape_cast %34 : vector<1x32x1xf32> to vector<32x1xf32>
    %36 = vector.broadcast %35 : vector<32x1xf32> to vector<32x1280xf32>
    %37 = arith.addf %33, %36 : vector<32x1280xf32>
    %38 = math.tanh %37 : vector<32x1280xf32>
    %c0_17 = arith.constant 0 : index
    %c0_18 = arith.constant 0 : index
    %39 = vector.load %arg6[%c0_17, %c0_18] : memref<1x32xf32, #tpu.memory_space<vmem>>, vector<1x32xf32>
    %cst_19 = arith.constant dense<0.000000e+00> : vector<1x1280xf32>
    %40 = tpu.matmul %39, %38, %cst_19 {dimension_numbers = #tpu.dot_dimension_numbers<[1], [0], [0], [1], [0, 0, 1, 1], [], []>} : vector<1x32xf32>, vector<32x1280xf32>, vector<1x1280xf32> -> vector<1x1280xf32>
    %c0_20 = arith.constant 0 : index
    %c0_21 = arith.constant 0 : index
    %41 = vector.load %arg7[%c0_20, %c0_21] : memref<1x1xf32, #tpu.memory_space<vmem>>, vector<1x1xf32>
    %42 = vector.broadcast %41 : vector<1x1xf32> to vector<1x1280xf32>
    %43 = arith.addf %40, %42 : vector<1x1280xf32>
    %c0_22 = arith.constant 0 : index
    %c0_23 = arith.constant 0 : index
    %44 = vector.load %arg8[%c0_22, %c0_23] : memref<1x1280xf32, #tpu.memory_space<vmem>>, vector<1x1280xf32>
    tpu.vector_store %arg8[%c0_22, %c0_23], %43 {strides = array<i32>} : memref<1x1280xf32, #tpu.memory_space<vmem>>, vector<1x1280xf32>,
    return
  }
  func.func @transform_0(%arg0: i32) -> (i32, i32) {
    %c0_i32 = arith.constant 0 : i32
    %c0_i32_0 = arith.constant 0 : i32
    return %c0_i32, %arg0 : i32, i32
  }
  func.func @transform_1(%arg0: i32) -> (i32, i32) {
    %c0_i32 = arith.constant 0 : i32
    %c0_i32_0 = arith.constant 0 : i32
    %c0_i32_1 = arith.constant 0 : i32
    return %c0_i32, %c0_i32_0 : i32, i32
  }
  func.func @transform_2(%arg0: i32) -> (i32, i32) {
    %c0_i32 = arith.constant 0 : i32
    %c0_i32_0 = arith.constant 0 : i32
    %c0_i32_1 = arith.constant 0 : i32
    return %c0_i32, %c0_i32_0 : i32, i32
  }
  func.func @transform_3(%arg0: i32) -> (i32, i32, i32) {
    %c0_i32 = arith.constant 0 : i32
    %c0_i32_0 = arith.constant 0 : i32
    %c0_i32_1 = arith.constant 0 : i32
    %c0_i32_2 = arith.constant 0 : i32
    return %c0_i32, %c0_i32_0, %c0_i32_1 : i32, i32, i32
  }
  func.func @transform_4(%arg0: i32) -> (i32, i32, i32) {
    %c0_i32 = arith.constant 0 : i32
    %c0_i32_0 = arith.constant 0 : i32
    %c0_i32_1 = arith.constant 0 : i32
    %c0_i32_2 = arith.constant 0 : i32
    return %c0_i32, %c0_i32_0, %c0_i32_1 : i32, i32, i32
  }
  func.func @transform_5(%arg0: i32) -> (i32, i32) {
    %c0_i32 = arith.constant 0 : i32
    %c0_i32_0 = arith.constant 0 : i32
    %c0_i32_1 = arith.constant 0 : i32
    return %c0_i32, %c0_i32_0 : i32, i32
  }
  func.func @transform_6(%arg0: i32) -> (i32, i32) {
    %c0_i32 = arith.constant 0 : i32
    %c0_i32_0 = arith.constant 0 : i32
    %c0_i32_1 = arith.constant 0 : i32
    return %c0_i32, %c0_i32_0 : i32, i32
  }
  func.func @transform_7(%arg0: i32) -> (i32, i32) {
    %c0_i32 = arith.constant 0 : i32
    %c0_i32_0 = arith.constant 0 : i32
    return %c0_i32, %arg0 : i32, i32
  }
}

</mosaic_0001>

<llo_original>
// kernel: tpu_custom_call.1
$region0: #{tpu_custom_call.1}
  #allocation0 [shape = 'u32[]', space=smem, size = 0x4, offset = 0x4, fixed_abs, tag = 'smem constant byte address 0x4 - core index']
  #allocation1 [shape = 'u32[144,128]{1,0:T(1,128)}', space=vmem, size = 0x12000, scoped, tag = 'internal scratch']
  #allocation2 [shape = 'f32[1,1]{1,0:T(1,128)S(1)}', space=vmem, size = 0x200, scoped, tag = 'scoped memory for tpu_custom_call.1']
  %s0 = inlined_call_operand.vmem [shape: f32[3,2560], index: 0, kind: input, shape index: {}]
  %s1 = inlined_call_operand.vmem [shape: f32[32,3], index: 1, kind: input, shape index: {}]
  %s2 = inlined_call_operand.vmem [shape: f32[32,1], index: 2, kind: input, shape index: {}]
  %s3 = inlined_call_operand.hbm [shape: f32[2,32,32], index: 3, kind: input, shape index: {}]
  %s4 = inlined_call_operand.vmem [shape: f32[2,32,1], index: 4, kind: input, shape index: {}]
  %s5 = inlined_call_operand.vmem [shape: f32[1,32], index: 5, kind: input, shape index: {}]
  %s6 = inlined_call_operand.<no memory space> [shape: f32[1,1], index: 6, kind: input, shape index: {}]
  %s7 = inlined_call_operand.hbm [shape: f32[1,2560], index: 7, kind: output, shape index: {}]
  %s8 = sld [smem:[#allocation0]]
  $region65: #{tpu_custom_call.1} parent=0
    _
  %s10 = ssub.s32 1, %s8
  %s11 = scalar_select 0, %s10, %s8
  %v12 = vstv %s6
  %13 = vst [vmem:[#allocation2] sm:$0x1] %v12
  $region1: #{tpu_custom_call.1} parent=0
    #allocation3 [shape = 'u8[32768]{0}', space=vmem, size = 0x8000, scoped, tag = 'input window, operand 3, single buffered']
    #allocation4 [shape = 's32[2]{0}', space=sflag, size = 0x8, scoped, tag = 'scoped memory for tpu_custom_call.1']
    #allocation5 [shape = 's32[2]{0}', space=sflag, size = 0x8, scoped, tag = 'scoped memory for tpu_custom_call.1']
    #allocation6 [shape = 'u8[10240]{0}', space=vmem, size = 0x2800, scoped, tag = 'output window, operand 0']
    %14 = vsyncpa [#allocation4], 0
    %15 = vsyncpa [#allocation5], 0
    %s16 = scalar_lea.sflag [#allocation5], 1
    %17 = vsyncpa %s16, 0
    loop: start=0, step=1, limit=4
    $region2: #{tpu_custom_call.1} parent=1 // loop_pre_header
      _
    $region3: #{tpu_custom_call.1} parent=1 // loop_header
      %s19 = sphi 0, %s23
      %p20 = scmp.ge.s32.totalorder %s19, 4
      %s29 = sphi 0, %s31
      %s32 = sphi 0, %s29
      %s33 = sphi 0, %s32
      %s49 = sphi 0, %s33
      %s53 = sphi 0, %s53
      %s55 = sphi 0, %s53
      %s56 = sphi 0, %s55
      %s70 = sphi 0, %s56
      %s74 = sphi 0, %s74
      %s76 = sphi 0, %s74
      %s77 = sphi 0, %s76
      %s91 = sphi 0, %s77
      %s95 = sphi 0, %s95
      %s97 = sphi 0, %s95
      %s98 = sphi 0, %s97
      %s112 = sphi 0, %s98
      %s116 = sphi 0, %s116
      %s118 = sphi 0, %s116
      %s119 = sphi 0, %s118
      %s133 = sphi 0, %s119
      %s137 = sphi 0, %s137
      %s139 = sphi 0, %s137
      %s140 = sphi 0, %s139
      %s154 = sphi 0, %s140
      %s158 = sphi 0, %s158
      %s160 = sphi 0, %s158
      %s161 = sphi 0, %s160
      %s175 = sphi 0, %s161
      %s181 = sphi 0, %s183
      %s184 = sphi 0, %s181
      %s185 = sphi 0, %s184
      %s201 = sphi 0, %s185
    $region4: #{tpu_custom_call.1} parent=1 // loop_header_branch
      %22 = sbr.rel (%p20) target = $region8
    $region5: #{tpu_custom_call.1} parent=1 // loop_body
      %s24 = ssub.s32 %s19, 1
      %s25 = ssub.s32 %s19, 2
      %s26 = sadd.s32 %s19, 1
      %s27 = ssub.s32 %s19, %s26
      %p28 = scmp.eq.s32.totalorder %s27, 0
      %s30 = sadd.s32 %s29, 1
      %s31 = scalar_select %p28, %s29, %s30
      %p34 = pneg %p28
      %p35 = scmp.eq.s32.totalorder %s19, 1
      %p36 = por %p34, %p35
      %p37 = scmp.ne.s32.totalorder %s29, %s32
      %p38 = scmp.eq.s32.totalorder %s19, 0
      %p39 = por %p37, %p38
      %p40 = scmp.ne.s32.totalorder %s29, %s32
      %p41 = scmp.eq.s32.totalorder %s24, 1
      %p42 = por %p40, %p41
      %p43 = scmp.ne.s32.totalorder %s32, %s33
      %p44 = scmp.eq.s32.totalorder %s24, 0
      %p45 = por %p43, %p44
      %p46 = scmp.ne.s32.totalorder %s32, %s33
      %p47 = scmp.eq.s32.totalorder %s25, 1
      %p48 = por %p46, %p47
      %p50 = scmp.ne.s32.totalorder %s33, %s49
      %p51 = scmp.eq.s32.totalorder %s25, 0
      %p52 = por %p50, %p51
      %s54 = sadd.s32 %s53, 1
      %p57 = scmp.eq.s32.totalorder %s19, 1
      %p58 = scmp.ne.s32.totalorder %s53, %s55
      %p59 = scmp.eq.s32.totalorder %s19, 0
      %p60 = por %p58, %p59
      %p61 = scmp.ne.s32.totalorder %s53, %s55
      %p62 = scmp.eq.s32.totalorder %s24, 1
      %p63 = por %p61, %p62
      %p64 = scmp.ne.s32.totalorder %s55, %s56
      %p65 = scmp.eq.s32.totalorder %s24, 0
      %p66 = por %p64, %p65
      %p67 = scmp.ne.s32.totalorder %s55, %s56
      %p68 = scmp.eq.s32.totalorder %s25, 1
      %p69 = por %p67, %p68
      %p71 = scmp.ne.s32.totalorder %s56, %s70
      %p72 = scmp.eq.s32.totalorder %s25, 0
      %p73 = por %p71, %p72
      %s75 = sadd.s32 %s74, 1
      %p78 = scmp.eq.s32.totalorder %s19, 1
      %p79 = scmp.ne.s32.totalorder %s74, %s76
      %p80 = scmp.eq.s32.totalorder %s19, 0
      %p81 = por %p79, %p80
      %p82 = scmp.ne.s32.totalorder %s74, %s76
      %p83 = scmp.eq.s32.totalorder %s24, 1
      %p84 = por %p82, %p83
      %p85 = scmp.ne.s32.totalorder %s76, %s77
      %p86 = scmp.eq.s32.totalorder %s24, 0
      %p87 = por %p85, %p86
      %p88 = scmp.ne.s32.totalorder %s76, %s77
      %p89 = scmp.eq.s32.totalorder %s25, 1
      %p90 = por %p88, %p89
      %p92 = scmp.ne.s32.totalorder %s77, %s91
      %p93 = scmp.eq.s32.totalorder %s25, 0
      %p94 = por %p92, %p93
      %s96 = sadd.s32 %s95, 1
      %p99 = scmp.eq.s32.totalorder %s19, 1
      %p100 = scmp.ne.s32.totalorder %s95, %s97
      %p101 = scmp.eq.s32.totalorder %s19, 0
      %p102 = por %p100, %p101
      %p103 = scmp.ne.s32.totalorder %s95, %s97
      %p104 = scmp.eq.s32.totalorder %s24, 1
      %p105 = por %p103, %p104
      %p106 = scmp.ne.s32.totalorder %s97, %s98
      %p107 = scmp.eq.s32.totalorder %s24, 0
      %p108 = por %p106, %p107
      %p109 = scmp.ne.s32.totalorder %s97, %s98
      %p110 = scmp.eq.s32.totalorder %s25, 1
      %p111 = por %p109, %p110
      %p113 = scmp.ne.s32.totalorder %s98, %s112
      %p114 = scmp.eq.s32.totalorder %s25, 0
      %p115 = por %p113, %p114
      %s117 = sadd.s32 %s116, 1
      %p120 = scmp.eq.s32.totalorder %s19, 1
      %p121 = scmp.ne.s32.totalorder %s116, %s118
      %p122 = scmp.eq.s32.totalorder %s19, 0
      %p123 = por %p121, %p122
      %p124 = scmp.ne.s32.totalorder %s116, %s118
      %p125 = scmp.eq.s32.totalorder %s24, 1
      %p126 = por %p124, %p125
      %p127 = scmp.ne.s32.totalorder %s118, %s119
      %p128 = scmp.eq.s32.totalorder %s24, 0
      %p129 = por %p127, %p128
      %p130 = scmp.ne.s32.totalorder %s118, %s119
      %p131 = scmp.eq.s32.totalorder %s25, 1
      %p132 = por %p130, %p131
      %p134 = scmp.ne.s32.totalorder %s119, %s133
      %p135 = scmp.eq.s32.totalorder %s25, 0
      %p136 = por %p134, %p135
      %s138 = sadd.s32 %s137, 1
      %p141 = scmp.eq.s32.totalorder %s19, 1
      %p142 = scmp.ne.s32.totalorder %s137, %s139
      %p143 = scmp.eq.s32.totalorder %s19, 0
      %p144 = por %p142, %p143
      %p145 = scmp.ne.s32.totalorder %s137, %s139
      %p146 = scmp.eq.s32.totalorder %s24, 1
      %p147 = por %p145, %p146
      %p148 = scmp.ne.s32.totalorder %s139, %s140
      %p149 = scmp.eq.s32.totalorder %s24, 0
      %p150 = por %p148, %p149
      %p151 = scmp.ne.s32.totalorder %s139, %s140
      %p152 = scmp.eq.s32.totalorder %s25, 1
      %p153 = por %p151, %p152
      %p155 = scmp.ne.s32.totalorder %s140, %s154
      %p156 = scmp.eq.s32.totalorder %s25, 0
      %p157 = por %p155, %p156
      %s159 = sadd.s32 %s158, 1
      %p162 = scmp.eq.s32.totalorder %s19, 1
      %p163 = scmp.ne.s32.totalorder %s158, %s160
      %p164 = scmp.eq.s32.totalorder %s19, 0
      %p165 = por %p163, %p164
      %p166 = scmp.ne.s32.totalorder %s158, %s160
      %p167 = scmp.eq.s32.totalorder %s24, 1
      %p168 = por %p166, %p167
      %p169 = scmp.ne.s32.totalorder %s160, %s161
      %p170 = scmp.eq.s32.totalorder %s24, 0
      %p171 = por %p169, %p170
      %p172 = scmp.ne.s32.totalorder %s160, %s161
      %p173 = scmp.eq.s32.totalorder %s25, 1
      %p174 = por %p172, %p173
      %p176 = scmp.ne.s32.totalorder %s161, %s175
      %p177 = scmp.eq.s32.totalorder %s25, 0
      %p178 = por %p176, %p177
      %s179 = ssub.s32 %s19, %s26
      %p180 = scmp.eq.s32.totalorder %s179, 0
      %s182 = sadd.s32 %s181, 1
      %s183 = scalar_select %p180, %s181, %s182
      %p186 = pneg %p180
      %p187 = scmp.eq.s32.totalorder %s19, 1
      %p188 = por %p186, %p187
      %p189 = scmp.ne.s32.totalorder %s181, %s184
      %p190 = scmp.eq.s32.totalorder %s19, 0
      %p191 = por %p189, %p190
      %p192 = scmp.ne.s32.totalorder %s181, %s184
      %p193 = scmp.eq.s32.totalorder %s24, 1
      %p194 = por %p192, %p193
      %p195 = scmp.ne.s32.totalorder %s184, %s185
      %p196 = scmp.eq.s32.totalorder %s24, 0
      %p197 = por %p195, %p196
      %p198 = scmp.ne.s32.totalorder %s184, %s185
      %p199 = scmp.eq.s32.totalorder %s25, 1
      %p200 = por %p198, %p199
      %p202 = scmp.ne.s32.totalorder %s185, %s201
      %p203 = scmp.eq.s32.totalorder %s25, 0
      %p204 = por %p202, %p203
      %p205 = scmp.le.s32.totalorder 1, %s19
      %p206 = scmp.lt.s32.totalorder %s19, 3
      %p207 = pnand %p205, %p206
      %p208 = pneg %p207
      // Predicated region
      $region9: #{tpu_custom_call.1} parent=5 // pred_check
        _
      $region10: #{tpu_custom_call.1} parent=5 // pred_check_branch
        %210 = sbr.rel (%p207) target = $region12
      $region11: #{tpu_custom_call.1} parent=5 // pred_region
        %s211 = ssub.s32 %s19, 1
        // Predicated region
        $region13: #{tpu_custom_call.1} parent=11 // pred_check
          %p212 = pneg %p66
        $region14: #{tpu_custom_call.1} parent=11 // pred_check_branch
          %214 = sbr.rel (%p212) target = $region16
        $region15: #{tpu_custom_call.1} parent=11 // pred_region
          _
        $region16: #{tpu_custom_call.1} parent=11 // pred_fallthru
          _
        // Predicated region
        $region17: #{tpu_custom_call.1} parent=11 // pred_check
          %p215 = pneg %p87
        $region18: #{tpu_custom_call.1} parent=11 // pred_check_branch
          %217 = sbr.rel (%p215) target = $region20
        $region19: #{tpu_custom_call.1} parent=11 // pred_region
          _
        $region20: #{tpu_custom_call.1} parent=11 // pred_fallthru
          _
        // Predicated region
        $region21: #{tpu_custom_call.1} parent=11 // pred_check
          %p218 = pneg %p108
        $region22: #{tpu_custom_call.1} parent=11 // pred_check_branch
          %220 = sbr.rel (%p218) target = $region24
        $region23: #{tpu_custom_call.1} parent=11 // pred_region
          %s222 = ssub.s32 1024, 1024
          %223 = vsyncadd [#allocation4], %s222
          %s224 = sshll.u32 [#allocation3], 4
          %s225 = int_to_ptr.vmem [resolvable:$true] %s224
          %230 = dma.hbm_to_vmem [thread:$0]  %s3, 1024, %s225, [#allocation4], 128, 128, 8
        $region24: #{tpu_custom_call.1} parent=11 // pred_fallthru
          _
        // Predicated region
        $region25: #{tpu_custom_call.1} parent=11 // pred_check
          %p231 = pneg %p129
        $region26: #{tpu_custom_call.1} parent=11 // pred_check_branch
          %233 = sbr.rel (%p231) target = $region28
        $region27: #{tpu_custom_call.1} parent=11 // pred_region
          _
        $region28: #{tpu_custom_call.1} parent=11 // pred_fallthru
          _
        // Predicated region
        $region29: #{tpu_custom_call.1} parent=11 // pred_check
          %p234 = pneg %p150
        $region30: #{tpu_custom_call.1} parent=11 // pred_check_branch
          %236 = sbr.rel (%p234) target = $region32
        $region31: #{tpu_custom_call.1} parent=11 // pred_region
          _
        $region32: #{tpu_custom_call.1} parent=11 // pred_fallthru
          _
        // Predicated region
        $region33: #{tpu_custom_call.1} parent=11 // pred_check
          %p237 = pneg %p171
        $region34: #{tpu_custom_call.1} parent=11 // pred_check_branch
          %239 = sbr.rel (%p237) target = $region36
        $region35: #{tpu_custom_call.1} parent=11 // pred_region
          _
        $region36: #{tpu_custom_call.1} parent=11 // pred_fallthru
          _
      $region12: #{tpu_custom_call.1} parent=5 // pred_fallthru
        _
      %p240 = scmp.lt.s32.totalorder %s19, 2
      // Predicated region
      $region37: #{tpu_custom_call.1} parent=5 // pred_check
        %p241 = pneg %p240
      $region38: #{tpu_custom_call.1} parent=5 // pred_check_branch
        %243 = sbr.rel (%p241) target = $region40
      $region39: #{tpu_custom_call.1} parent=5 // pred_region
        // Predicated region
        $region41: #{tpu_custom_call.1} parent=39 // pred_check
          %p244 = pneg %p39
        $region42: #{tpu_custom_call.1} parent=39 // pred_check_branch
          %246 = sbr.rel (%p244) target = $region44
        $region43: #{tpu_custom_call.1} parent=39 // pred_region
          %s247 = smul.u32 10, %s19
          %p248 = scmp.lt.s32.totalorder %s247, 19
          %s249 = scalar_select %p248, %s247, 19
          %s250 = smul.addr %s249, 4
          %s251 = scalar_lea.vmem %s0, %s250
          %s252 = smul.u32 10, %s19
        $region44: #{tpu_custom_call.1} parent=39 // pred_fallthru
          _
      $region40: #{tpu_custom_call.1} parent=5 // pred_fallthru
        _
      %p253 = scmp.le.s32.totalorder 1, %s19
      %p254 = scmp.lt.s32.totalorder %s19, 3
      %p255 = pnand %p253, %p254
      %p256 = pneg %p255
      // Predicated region
      $region45: #{tpu_custom_call.1} parent=5 // pred_check
        _
      $region46: #{tpu_custom_call.1} parent=5 // pred_check_branch
        %258 = sbr.rel (%p255) target = $region48
      $region47: #{tpu_custom_call.1} parent=5 // pred_region
        %s259 = ssub.s32 %s19, 1
        // Predicated region
        $region49: #{tpu_custom_call.1} parent=47 // pred_check
          %p260 = pneg %p108
        $region50: #{tpu_custom_call.1} parent=47 // pred_check_branch
          %262 = sbr.rel (%p260) target = $region52
        $region51: #{tpu_custom_call.1} parent=47 // pred_region
          %263 = dma.done [#allocation4], 1024
        $region52: #{tpu_custom_call.1} parent=47 // pred_fallthru
          _
        %s264 = smul.u32 10, %s24
        %p265 = scmp.lt.s32.totalorder %s264, 19
        %s266 = scalar_select %p265, %s264, 19
        %s267 = smul.addr %s266, 4
        %s268 = scalar_lea.vmem %s0, %s267
        %p269 = pneg %p45
        %p270 = pneg %p42
        %p271 = pneg %p66
        %p272 = pneg %p63
        %p273 = pneg %p87
        %p274 = pneg %p84
        %p275 = pneg %p108
        %p276 = pneg %p105
        %p277 = pneg %p129
        %p278 = pneg %p126
        %p279 = pneg %p150
        %p280 = pneg %p147
        %p281 = pneg %p171
        %p282 = pneg %p168
        %p283 = pneg %p197
        %p284 = pneg %p194
        %s285 = sand.u32 %s184, 1
        %s286 = scalar_lea.sflag [#allocation5], %s285
        %s287 = sand.u32 %s184, 1
        %s288 = smul.addr %s287, 10
        %s289 = scalar_lea.vmem [#allocation6], %s288
        %s290 = smul.u32 10, %s24
        %p291 = scmp.lt.s32.totalorder %s290, 19
        %s292 = scalar_select %p291, %s290, 19
        %s293 = smul.addr %s292, 4
        %s294 = scalar_lea.vmem %s0, %s293
        %s295 = smul.u32 10, %s24
        %s296 = smul.u32 10, %s24
        %v297 = vld [vmem:[%s294] sm:$0x77]
        %v298 = vld [vmem:[%s294 + $0x8] sm:$0x77]
        %v299 = vld [vmem:[%s294 + $0x10] sm:$0x77]
        %v300 = vld [vmem:[%s294 + $0x18] sm:$0x77]
        %v301 = vld [vmem:[%s294 + $0x20] sm:$0x77]
        %v302 = vld [vmem:[%s1] sm:$0xff]
        %v303 = vld [vmem:[%s1 + $0x8] sm:$0xff]
        %v304 = vld [vmem:[%s1 + $0x10] sm:$0xff]
        %v305 = vld [vmem:[%s1 + $0x18] sm:$0xff]
        %307 = vset.pattern.permute.xlu0 0
        %308 = vperm.xlu0 %307, %v302
        %v309 = vpop.permute.xlu0 %308
        %312 = vset.pattern.permute.xlu0 0
        %313 = vperm.xlu0 %312, %v303
        %v314 = vpop.permute.xlu0 %313
        %317 = vset.pattern.permute.xlu0 0
        %318 = vperm.xlu0 %317, %v304
        %v319 = vpop.permute.xlu0 %318
        %322 = vset.pattern.permute.xlu0 0
        %323 = vperm.xlu0 %322, %v305
        %v324 = vpop.permute.xlu0 %323
        %v331 = vlaneseq
        %v332 = vshrl.u32 %v331, 7
        %v333 = vsub.s32 0, %v332
        %v334 = vrot.slane %v297, %v333
        %v335 = vlaneseq
        %v336 = vshrl.u32 %v335, 7
        %v337 = vsub.s32 4, %v336
        %v338 = vrot.slane %v297, %v337
        %v339 = vlaneseq
        %v340 = vshrl.u32 %v339, 7
        %v341 = vsub.s32 0, %v340
        %v342 = vrot.slane %v298, %v341
        %v343 = vlaneseq
        %v344 = vshrl.u32 %v343, 7
        %v345 = vsub.s32 4, %v344
        %v346 = vrot.slane %v298, %v345
        %v347 = vlaneseq
        %v348 = vshrl.u32 %v347, 7
        %v349 = vsub.s32 0, %v348
        %v350 = vrot.slane %v299, %v349
        %v351 = vlaneseq
        %v352 = vshrl.u32 %v351, 7
        %v353 = vsub.s32 4, %v352
        %v354 = vrot.slane %v299, %v353
        %v355 = vlaneseq
        %v356 = vshrl.u32 %v355, 7
        %v357 = vsub.s32 0, %v356
        %v358 = vrot.slane %v300, %v357
        %v359 = vlaneseq
        %v360 = vshrl.u32 %v359, 7
        %v361 = vsub.s32 4, %v360
        %v362 = vrot.slane %v300, %v361
        %v363 = vlaneseq
        %v364 = vshrl.u32 %v363, 7
        %v365 = vsub.s32 0, %v364
        %v366 = vrot.slane %v301, %v365
        %v367 = vlaneseq
        %v368 = vshrl.u32 %v367, 7
        %v369 = vsub.s32 4, %v368
        %v370 = vrot.slane %v301, %v369
        %v381 = vlaneseq
        %v382 = vshrl.u32 %v381, 7
        %v383 = vsub.s32 0, %v382
        %v384 = vrot.slane %v334, %v383
        %v385 = vlaneseq
        %v386 = vshrl.u32 %v385, 7
        %v387 = vsub.s32 0, %v386
        %v388 = vrot.slane %v338, %v387
        %v389 = vlaneseq
        %v390 = vshrl.u32 %v389, 7
        %v391 = vsub.s32 0, %v390
        %v392 = vrot.slane %v342, %v391
        %v393 = vlaneseq
        %v394 = vshrl.u32 %v393, 7
        %v395 = vsub.s32 0, %v394
        %v396 = vrot.slane %v346, %v395
        %v397 = vlaneseq
        %v398 = vshrl.u32 %v397, 7
        %v399 = vsub.s32 0, %v398
        %v400 = vrot.slane %v350, %v399
        %v401 = vlaneseq
        %v402 = vshrl.u32 %v401, 7
        %v403 = vsub.s32 0, %v402
        %v404 = vrot.slane %v354, %v403
        %v405 = vlaneseq
        %v406 = vshrl.u32 %v405, 7
        %v407 = vsub.s32 0, %v406
        %v408 = vrot.slane %v358, %v407
        %v409 = vlaneseq
        %v410 = vshrl.u32 %v409, 7
        %v411 = vsub.s32 0, %v410
        %v412 = vrot.slane %v362, %v411
        %v413 = vlaneseq
        %v414 = vshrl.u32 %v413, 7
        %v415 = vsub.s32 0, %v414
        %v416 = vrot.slane %v366, %v415
        %v417 = vlaneseq
        %v418 = vshrl.u32 %v417, 7
        %v419 = vsub.s32 0, %v418
        %v420 = vrot.slane %v370, %v419
        %v421 = vmul.f32 %v309, %v384
        %v422 = vmul.f32 %v309, %v388
        %v423 = vmul.f32 %v309, %v392
        %v424 = vmul.f32 %v309, %v396
        %v425 = vmul.f32 %v309, %v400
        %v426 = vmul.f32 %v309, %v404
        %v427 = vmul.f32 %v309, %v408
        %v428 = vmul.f32 %v309, %v412
        %v429 = vmul.f32 %v309, %v416
        %v430 = vmul.f32 %v309, %v420
        %v431 = vmul.f32 %v314, %v384
        %v432 = vmul.f32 %v314, %v388
        %v433 = vmul.f32 %v314, %v392
        %v434 = vmul.f32 %v314, %v396
        %v435 = vmul.f32 %v314, %v400
        %v436 = vmul.f32 %v314, %v404
        %v437 = vmul.f32 %v314, %v408
        %v438 = vmul.f32 %v314, %v412
        %v439 = vmul.f32 %v314, %v416
        %v440 = vmul.f32 %v314, %v420
        %v441 = vmul.f32 %v319, %v384
        %v442 = vmul.f32 %v319, %v388
        %v443 = vmul.f32 %v319, %v392
        %v444 = vmul.f32 %v319, %v396
        %v445 = vmul.f32 %v319, %v400
        %v446 = vmul.f32 %v319, %v404
        %v447 = vmul.f32 %v319, %v408
        %v448 = vmul.f32 %v319, %v412
        %v449 = vmul.f32 %v319, %v416
        %v450 = vmul.f32 %v319, %v420
        %v451 = vmul.f32 %v324, %v384
        %v452 = vmul.f32 %v324, %v388
        %v453 = vmul.f32 %v324, %v392
        %v454 = vmul.f32 %v324, %v396
        %v455 = vmul.f32 %v324, %v400
        %v456 = vmul.f32 %v324, %v404
        %v457 = vmul.f32 %v324, %v408
        %v458 = vmul.f32 %v324, %v412
        %v459 = vmul.f32 %v324, %v416
        %v460 = vmul.f32 %v324, %v420
        %461 = vset.pattern.permute.xlu0 1
        %462 = vperm.xlu0 %461, %v302
        %v463 = vpop.permute.xlu0 %462
        %465 = vset.pattern.permute.xlu0 1
        %466 = vperm.xlu0 %465, %v303
        %v467 = vpop.permute.xlu0 %466
        %469 = vset.pattern.permute.xlu0 1
        %470 = vperm.xlu0 %469, %v304
        %v471 = vpop.permute.xlu0 %470
        %473 = vset.pattern.permute.xlu0 1
        %474 = vperm.xlu0 %473, %v305
        %v475 = vpop.permute.xlu0 %474
        %v477 = vlaneseq
        %v478 = vshrl.u32 %v477, 7
        %v479 = vsub.s32 1, %v478
        %v480 = vrot.slane %v297, %v479
        %v481 = vlaneseq
        %v482 = vshrl.u32 %v481, 7
        %v483 = vsub.s32 5, %v482
        %v484 = vrot.slane %v297, %v483
        %v485 = vlaneseq
        %v486 = vshrl.u32 %v485, 7
        %v487 = vsub.s32 1, %v486
        %v488 = vrot.slane %v298, %v487
        %v489 = vlaneseq
        %v490 = vshrl.u32 %v489, 7
        %v491 = vsub.s32 5, %v490
        %v492 = vrot.slane %v298, %v491
        %v493 = vlaneseq
        %v494 = vshrl.u32 %v493, 7
        %v495 = vsub.s32 1, %v494
        %v496 = vrot.slane %v299, %v495
        %v497 = vlaneseq
        %v498 = vshrl.u32 %v497, 7
        %v499 = vsub.s32 5, %v498
        %v500 = vrot.slane %v299, %v499
        %v501 = vlaneseq
        %v502 = vshrl.u32 %v501, 7
        %v503 = vsub.s32 1, %v502
        %v504 = vrot.slane %v300, %v503
        %v505 = vlaneseq
        %v506 = vshrl.u32 %v505, 7
        %v507 = vsub.s32 5, %v506
        %v508 = vrot.slane %v300, %v507
        %v509 = vlaneseq
        %v510 = vshrl.u32 %v509, 7
        %v511 = vsub.s32 1, %v510
        %v512 = vrot.slane %v301, %v511
        %v513 = vlaneseq
        %v514 = vshrl.u32 %v513, 7
        %v515 = vsub.s32 5, %v514
        %v516 = vrot.slane %v301, %v515
        %v527 = vlaneseq
        %v528 = vshrl.u32 %v527, 7
        %v529 = vsub.s32 1, %v528
        %v530 = vrot.slane %v480, %v529
        %v531 = vlaneseq
        %v532 = vshrl.u32 %v531, 7
        %v533 = vsub.s32 1, %v532
        %v534 = vrot.slane %v484, %v533
        %v535 = vlaneseq
        %v536 = vshrl.u32 %v535, 7
        %v537 = vsub.s32 1, %v536
        %v538 = vrot.slane %v488, %v537
        %v539 = vlaneseq
        %v540 = vshrl.u32 %v539, 7
        %v541 = vsub.s32 1, %v540
        %v542 = vrot.slane %v492, %v541
        %v543 = vlaneseq
        %v544 = vshrl.u32 %v543, 7
        %v545 = vsub.s32 1, %v544
        %v546 = vrot.slane %v496, %v545
        %v547 = vlaneseq
        %v548 = vshrl.u32 %v547, 7
        %v549 = vsub.s32 1, %v548
        %v550 = vrot.slane %v500, %v549
        %v551 = vlaneseq
        %v552 = vshrl.u32 %v551, 7
        %v553 = vsub.s32 1, %v552
        %v554 = vrot.slane %v504, %v553
        %v555 = vlaneseq
        %v556 = vshrl.u32 %v555, 7
        %v557 = vsub.s32 1, %v556
        %v558 = vrot.slane %v508, %v557
        %v559 = vlaneseq
        %v560 = vshrl.u32 %v559, 7
        %v561 = vsub.s32 1, %v560
        %v562 = vrot.slane %v512, %v561
        %v563 = vlaneseq
        %v564 = vshrl.u32 %v563, 7
        %v565 = vsub.s32 1, %v564
        %v566 = vrot.slane %v516, %v565
        %v567 = vmul.f32 %v463, %v530
        %v568 = vmul.f32 %v463, %v534
        %v569 = vmul.f32 %v463, %v538
        %v570 = vmul.f32 %v463, %v542
        %v571 = vmul.f32 %v463, %v546
        %v572 = vmul.f32 %v463, %v550
        %v573 = vmul.f32 %v463, %v554
        %v574 = vmul.f32 %v463, %v558
        %v575 = vmul.f32 %v463, %v562
        %v576 = vmul.f32 %v463, %v566
        %v577 = vmul.f32 %v467, %v530
        %v578 = vmul.f32 %v467, %v534
        %v579 = vmul.f32 %v467, %v538
        %v580 = vmul.f32 %v467, %v542
        %v581 = vmul.f32 %v467, %v546
        %v582 = vmul.f32 %v467, %v550
        %v583 = vmul.f32 %v467, %v554
        %v584 = vmul.f32 %v467, %v558
        %v585 = vmul.f32 %v467, %v562
        %v586 = vmul.f32 %v467, %v566
        %v587 = vmul.f32 %v471, %v530
        %v588 = vmul.f32 %v471, %v534
        %v589 = vmul.f32 %v471, %v538
        %v590 = vmul.f32 %v471, %v542
        %v591 = vmul.f32 %v471, %v546
        %v592 = vmul.f32 %v471, %v550
        %v593 = vmul.f32 %v471, %v554
        %v594 = vmul.f32 %v471, %v558
        %v595 = vmul.f32 %v471, %v562
        %v596 = vmul.f32 %v471, %v566
        %v597 = vmul.f32 %v475, %v530
        %v598 = vmul.f32 %v475, %v534
        %v599 = vmul.f32 %v475, %v538
        %v600 = vmul.f32 %v475, %v542
        %v601 = vmul.f32 %v475, %v546
        %v602 = vmul.f32 %v475, %v550
        %v603 = vmul.f32 %v475, %v554
        %v604 = vmul.f32 %v475, %v558
        %v605 = vmul.f32 %v475, %v562
        %v606 = vmul.f32 %v475, %v566
        %v607 = vadd.f32 %v421, %v567
        %v608 = vadd.f32 %v422, %v568
        %v609 = vadd.f32 %v423, %v569
        %v610 = vadd.f32 %v424, %v570
        %v611 = vadd.f32 %v425, %v571
        %v612 = vadd.f32 %v426, %v572
        %v613 = vadd.f32 %v427, %v573
        %v614 = vadd.f32 %v428, %v574
        %v615 = vadd.f32 %v429, %v575
        %v616 = vadd.f32 %v430, %v576
        %v617 = vadd.f32 %v431, %v577
        %v618 = vadd.f32 %v432, %v578
        %v619 = vadd.f32 %v433, %v579
        %v620 = vadd.f32 %v434, %v580
        %v621 = vadd.f32 %v435, %v581
        %v622 = vadd.f32 %v436, %v582
        %v623 = vadd.f32 %v437, %v583
        %v624 = vadd.f32 %v438, %v584
        %v625 = vadd.f32 %v439, %v585
        %v626 = vadd.f32 %v440, %v586
        %v627 = vadd.f32 %v441, %v587
        %v628 = vadd.f32 %v442, %v588
        %v629 = vadd.f32 %v443, %v589
        %v630 = vadd.f32 %v444, %v590
        %v631 = vadd.f32 %v445, %v591
        %v632 = vadd.f32 %v446, %v592
        %v633 = vadd.f32 %v447, %v593
        %v634 = vadd.f32 %v448, %v594
        %v635 = vadd.f32 %v449, %v595
        %v636 = vadd.f32 %v450, %v596
        %v637 = vadd.f32 %v451, %v597
        %v638 = vadd.f32 %v452, %v598
        %v639 = vadd.f32 %v453, %v599
        %v640 = vadd.f32 %v454, %v600
        %v641 = vadd.f32 %v455, %v601
        %v642 = vadd.f32 %v456, %v602
        %v643 = vadd.f32 %v457, %v603
        %v644 = vadd.f32 %v458, %v604
        %v645 = vadd.f32 %v459, %v605
        %v646 = vadd.f32 %v460, %v606
        %647 = vset.pattern.permute.xlu0 2
        %648 = vperm.xlu0 %647, %v302
        %v649 = vpop.permute.xlu0 %648
        %651 = vset.pattern.permute.xlu0 2
        %652 = vperm.xlu0 %651, %v303
        %v653 = vpop.permute.xlu0 %652
        %655 = vset.pattern.permute.xlu0 2
        %656 = vperm.xlu0 %655, %v304
        %v657 = vpop.permute.xlu0 %656
        %659 = vset.pattern.permute.xlu0 2
        %660 = vperm.xlu0 %659, %v305
        %v661 = vpop.permute.xlu0 %660
        %v663 = vlaneseq
        %v664 = vshrl.u32 %v663, 7
        %v665 = vsub.s32 2, %v664
        %v666 = vrot.slane %v297, %v665
        %v667 = vlaneseq
        %v668 = vshrl.u32 %v667, 7
        %v669 = vsub.s32 6, %v668
        %v670 = vrot.slane %v297, %v669
        %v671 = vlaneseq
        %v672 = vshrl.u32 %v671, 7
        %v673 = vsub.s32 2, %v672
        %v674 = vrot.slane %v298, %v673
        %v675 = vlaneseq
        %v676 = vshrl.u32 %v675, 7
        %v677 = vsub.s32 6, %v676
        %v678 = vrot.slane %v298, %v677
        %v679 = vlaneseq
        %v680 = vshrl.u32 %v679, 7
        %v681 = vsub.s32 2, %v680
        %v682 = vrot.slane %v299, %v681
        %v683 = vlaneseq
        %v684 = vshrl.u32 %v683, 7
        %v685 = vsub.s32 6, %v684
        %v686 = vrot.slane %v299, %v685
        %v687 = vlaneseq
        %v688 = vshrl.u32 %v687, 7
        %v689 = vsub.s32 2, %v688
        %v690 = vrot.slane %v300, %v689
        %v691 = vlaneseq
        %v692 = vshrl.u32 %v691, 7
        %v693 = vsub.s32 6, %v692
        %v694 = vrot.slane %v300, %v693
        %v695 = vlaneseq
        %v696 = vshrl.u32 %v695, 7
        %v697 = vsub.s32 2, %v696
        %v698 = vrot.slane %v301, %v697
        %v699 = vlaneseq
        %v700 = vshrl.u32 %v699, 7
        %v701 = vsub.s32 6, %v700
        %v702 = vrot.slane %v301, %v701
        %v713 = vlaneseq
        %v714 = vshrl.u32 %v713, 7
        %v715 = vsub.s32 2, %v714
        %v716 = vrot.slane %v666, %v715
        %v717 = vlaneseq
        %v718 = vshrl.u32 %v717, 7
        %v719 = vsub.s32 2, %v718
        %v720 = vrot.slane %v670, %v719
        %v721 = vlaneseq
        %v722 = vshrl.u32 %v721, 7
        %v723 = vsub.s32 2, %v722
        %v724 = vrot.slane %v674, %v723
        %v725 = vlaneseq
        %v726 = vshrl.u32 %v725, 7
        %v727 = vsub.s32 2, %v726
        %v728 = vrot.slane %v678, %v727
        %v729 = vlaneseq
        %v730 = vshrl.u32 %v729, 7
        %v731 = vsub.s32 2, %v730
        %v732 = vrot.slane %v682, %v731
        %v733 = vlaneseq
        %v734 = vshrl.u32 %v733, 7
        %v735 = vsub.s32 2, %v734
        %v736 = vrot.slane %v686, %v735
        %v737 = vlaneseq
        %v738 = vshrl.u32 %v737, 7
        %v739 = vsub.s32 2, %v738
        %v740 = vrot.slane %v690, %v739
        %v741 = vlaneseq
        %v742 = vshrl.u32 %v741, 7
        %v743 = vsub.s32 2, %v742
        %v744 = vrot.slane %v694, %v743
        %v745 = vlaneseq
        %v746 = vshrl.u32 %v745, 7
        %v747 = vsub.s32 2, %v746
        %v748 = vrot.slane %v698, %v747
        %v749 = vlaneseq
        %v750 = vshrl.u32 %v749, 7
        %v751 = vsub.s32 2, %v750
        %v752 = vrot.slane %v702, %v751
        %v753 = vmul.f32 %v649, %v716
        %v754 = vmul.f32 %v649, %v720
        %v755 = vmul.f32 %v649, %v724
        %v756 = vmul.f32 %v649, %v728
        %v757 = vmul.f32 %v649, %v732
        %v758 = vmul.f32 %v649, %v736
        %v759 = vmul.f32 %v649, %v740
        %v760 = vmul.f32 %v649, %v744
        %v761 = vmul.f32 %v649, %v748
        %v762 = vmul.f32 %v649, %v752
        %v763 = vmul.f32 %v653, %v716
        %v764 = vmul.f32 %v653, %v720
        %v765 = vmul.f32 %v653, %v724
        %v766 = vmul.f32 %v653, %v728
        %v767 = vmul.f32 %v653, %v732
        %v768 = vmul.f32 %v653, %v736
        %v769 = vmul.f32 %v653, %v740
        %v770 = vmul.f32 %v653, %v744
        %v771 = vmul.f32 %v653, %v748
        %v772 = vmul.f32 %v653, %v752
        %v773 = vmul.f32 %v657, %v716
        %v774 = vmul.f32 %v657, %v720
        %v775 = vmul.f32 %v657, %v724
        %v776 = vmul.f32 %v657, %v728
        %v777 = vmul.f32 %v657, %v732
        %v778 = vmul.f32 %v657, %v736
        %v779 = vmul.f32 %v657, %v740
        %v780 = vmul.f32 %v657, %v744
        %v781 = vmul.f32 %v657, %v748
        %v782 = vmul.f32 %v657, %v752
        %v783 = vmul.f32 %v661, %v716
        %v784 = vmul.f32 %v661, %v720
        %v785 = vmul.f32 %v661, %v724
        %v786 = vmul.f32 %v661, %v728
        %v787 = vmul.f32 %v661, %v732
        %v788 = vmul.f32 %v661, %v736
        %v789 = vmul.f32 %v661, %v740
        %v790 = vmul.f32 %v661, %v744
        %v791 = vmul.f32 %v661, %v748
        %v792 = vmul.f32 %v661, %v752
        %v793 = vadd.f32 %v607, %v753
        %v794 = vadd.f32 %v608, %v754
        %v795 = vadd.f32 %v609, %v755
        %v796 = vadd.f32 %v610, %v756
        %v797 = vadd.f32 %v611, %v757
        %v798 = vadd.f32 %v612, %v758
        %v799 = vadd.f32 %v613, %v759
        %v800 = vadd.f32 %v614, %v760
        %v801 = vadd.f32 %v615, %v761
        %v802 = vadd.f32 %v616, %v762
        %v803 = vadd.f32 %v617, %v763
        %v804 = vadd.f32 %v618, %v764
        %v805 = vadd.f32 %v619, %v765
        %v806 = vadd.f32 %v620, %v766
        %v807 = vadd.f32 %v621, %v767
        %v808 = vadd.f32 %v622, %v768
        %v809 = vadd.f32 %v623, %v769
        %v810 = vadd.f32 %v624, %v770
        %v811 = vadd.f32 %v625, %v771
        %v812 = vadd.f32 %v626, %v772
        %v813 = vadd.f32 %v627, %v773
        %v814 = vadd.f32 %v628, %v774
        %v815 = vadd.f32 %v629, %v775
        %v816 = vadd.f32 %v630, %v776
        %v817 = vadd.f32 %v631, %v777
        %v818 = vadd.f32 %v632, %v778
        %v819 = vadd.f32 %v633, %v779
        %v820 = vadd.f32 %v634, %v780
        %v821 = vadd.f32 %v635, %v781
        %v822 = vadd.f32 %v636, %v782
        %v823 = vadd.f32 %v637, %v783
        %v824 = vadd.f32 %v638, %v784
        %v825 = vadd.f32 %v639, %v785
        %v826 = vadd.f32 %v640, %v786
        %v827 = vadd.f32 %v641, %v787
        %v828 = vadd.f32 %v642, %v788
        %v829 = vadd.f32 %v643, %v789
        %v830 = vadd.f32 %v644, %v790
        %v831 = vadd.f32 %v645, %v791
        %v832 = vadd.f32 %v646, %v792
        %v833 = vld [vmem:[%s2] sm:$0xff]
        %v834 = vld [vmem:[%s2 + $0x8] sm:$0xff]
        %v835 = vld [vmem:[%s2 + $0x10] sm:$0xff]
        %v836 = vld [vmem:[%s2 + $0x18] sm:$0xff]
        %838 = vset.pattern.permute.xlu0 0
        %839 = vperm.xlu0 %838, %v833
        %v840 = vpop.permute.xlu0 %839
        %843 = vset.pattern.permute.xlu0 0
        %844 = vperm.xlu0 %843, %v834
        %v845 = vpop.permute.xlu0 %844
        %848 = vset.pattern.permute.xlu0 0
        %849 = vperm.xlu0 %848, %v835
        %v850 = vpop.permute.xlu0 %849
        %853 = vset.pattern.permute.xlu0 0
        %854 = vperm.xlu0 %853, %v836
        %v855 = vpop.permute.xlu0 %854
        %v857 = vadd.f32 %v793, %v840
        %v858 = vadd.f32 %v794, %v840
        %v859 = vadd.f32 %v795, %v840
        %v860 = vadd.f32 %v796, %v840
        %v861 = vadd.f32 %v797, %v840
        %v862 = vadd.f32 %v798, %v840
        %v863 = vadd.f32 %v799, %v840
        %v864 = vadd.f32 %v800, %v840
        %v865 = vadd.f32 %v801, %v840
        %v866 = vadd.f32 %v802, %v840
        %v867 = vadd.f32 %v803, %v845
        %v868 = vadd.f32 %v804, %v845
        %v869 = vadd.f32 %v805, %v845
        %v870 = vadd.f32 %v806, %v845
        %v871 = vadd.f32 %v807, %v845
        %v872 = vadd.f32 %v808, %v845
        %v873 = vadd.f32 %v809, %v845
        %v874 = vadd.f32 %v810, %v845
        %v875 = vadd.f32 %v811, %v845
        %v876 = vadd.f32 %v812, %v845
        %v877 = vadd.f32 %v813, %v850
        %v878 = vadd.f32 %v814, %v850
        %v879 = vadd.f32 %v815, %v850
        %v880 = vadd.f32 %v816, %v850
        %v881 = vadd.f32 %v817, %v850
        %v882 = vadd.f32 %v818, %v850
        %v883 = vadd.f32 %v819, %v850
        %v884 = vadd.f32 %v820, %v850
        %v885 = vadd.f32 %v821, %v850
        %v886 = vadd.f32 %v822, %v850
        %v887 = vadd.f32 %v823, %v855
        %v888 = vadd.f32 %v824, %v855
        %v889 = vadd.f32 %v825, %v855
        %v890 = vadd.f32 %v826, %v855
        %v891 = vadd.f32 %v827, %v855
        %v892 = vadd.f32 %v828, %v855
        %v893 = vadd.f32 %v829, %v855
        %v894 = vadd.f32 %v830, %v855
        %v895 = vadd.f32 %v831, %v855
        %v896 = vadd.f32 %v832, %v855
        %v897 = vtanh.pop %v857
        %v898 = vtanh.pop %v858
        %v899 = vtanh.pop %v859
        %v900 = vtanh.pop %v860
        %v901 = vtanh.pop %v861
        %v902 = vtanh.pop %v862
        %v903 = vtanh.pop %v863
        %v904 = vtanh.pop %v864
        %v905 = vtanh.pop %v865
        %v906 = vtanh.pop %v866
        %v907 = vtanh.pop %v867
        %v908 = vtanh.pop %v868
        %v909 = vtanh.pop %v869
        %v910 = vtanh.pop %v870
        %v911 = vtanh.pop %v871
        %v912 = vtanh.pop %v872
        %v913 = vtanh.pop %v873
        %v914 = vtanh.pop %v874
        %v915 = vtanh.pop %v875
        %v916 = vtanh.pop %v876
        %v917 = vtanh.pop %v877
        %v918 = vtanh.pop %v878
        %v919 = vtanh.pop %v879
        %v920 = vtanh.pop %v880
        %v921 = vtanh.pop %v881
        %v922 = vtanh.pop %v882
        %v923 = vtanh.pop %v883
        %v924 = vtanh.pop %v884
        %v925 = vtanh.pop %v885
        %v926 = vtanh.pop %v886
        %v927 = vtanh.pop %v887
        %v928 = vtanh.pop %v888
        %v929 = vtanh.pop %v889
        %v930 = vtanh.pop %v890
        %v931 = vtanh.pop %v891
        %v932 = vtanh.pop %v892
        %v933 = vtanh.pop %v893
        %v934 = vtanh.pop %v894
        %v935 = vtanh.pop %v895
        %v936 = vtanh.pop %v896
        %v937 = vld [vmem:[#allocation3] sm:$0xff]
        %v938 = vld [vmem:[#allocation3 + $0x8] sm:$0xff]
        %v939 = vld [vmem:[#allocation3 + $0x10] sm:$0xff]
        %v940 = vld [vmem:[#allocation3 + $0x18] sm:$0xff]
        %v941 = vld [vmem:[%s4] sm:$0xff]
        %v942 = vld [vmem:[%s4 + $0x8] sm:$0xff]
        %v943 = vld [vmem:[%s4 + $0x10] sm:$0xff]
        %v944 = vld [vmem:[%s4 + $0x18] sm:$0xff]
        %946 = vset.pattern.permute.xlu0 0
        %947 = vperm.xlu0 %946, %v941
        %v948 = vpop.permute.xlu0 %947
        %951 = vset.pattern.permute.xlu0 0
        %952 = vperm.xlu0 %951, %v942
        %v953 = vpop.permute.xlu0 %952
        %956 = vset.pattern.permute.xlu0 0
        %957 = vperm.xlu0 %956, %v943
        %v958 = vpop.permute.xlu0 %957
        %961 = vset.pattern.permute.xlu0 0
        %962 = vperm.xlu0 %961, %v944
        %v963 = vpop.permute.xlu0 %962
        %vm965 = vcmask 261120
        %v967 = vsel %vm965, %v937, 0
        %v970 = vsel %vm965, %v938, 0
        %v973 = vsel %vm965, %v939, 0
        %v976 = vsel %vm965, %v940, 0
        %978 = vmatprep.subr.mxu0 0.0
        %979 = vmatpush1.msra.mxu0 0.0
        %980 = vmatprep.subr.mxu0 0.0
        %981 = vmatpush1.msra.mxu0 0.0
        %982 = vmatprep.subr.mxu0 0.0
        %983 = vmatpush1.msra.mxu0 0.0
        %984 = vmatprep.subr.mxu0 0.0
        %985 = vmatpush1.msra.mxu0 0.0
        %986 = vmatprep.subr.mxu0 0.0
        %987 = vmatpush1.msra.mxu0 0.0
        %988 = vmatprep.subr.mxu0 0.0
        %989 = vmatpush1.msra.mxu0 0.0
        %990 = vmatprep.subr.mxu0 0.0
        %991 = vmatpush1.msra.mxu0 0.0
        %992 = vmatprep.subr.mxu0 0.0
        %993 = vmatpush1.msra.mxu0 0.0
        %994 = vmatprep.subr.mxu0 0.0
        %995 = vmatpush1.msra.mxu0 0.0
        %996 = vmatprep.subr.mxu0 0.0
        %997 = vmatpush1.msra.mxu0 0.0
        %998 = vmatprep.subr.mxu0 0.0
        %999 = vmatpush1.msra.mxu0 0.0
        %1000 = vmatprep.subr.mxu0 0.0
        %1001 = vmatpush1.msra.mxu0 0.0
        %1002 = vmatprep.subr.mxu0 %v928
        %1003 = vmatpush1.msra.mxu0 %v927
        %1004 = vmatprep.subr.mxu0 %v918
        %1005 = vmatpush1.msra.mxu0 %v917
        %1006 = vmatprep.subr.mxu0 %v908
        %1007 = vmatpush1.msra.mxu0 %v907
        %1008 = vmatprep.subr.mxu0 %v898
        %1009 = vmatpush1.msra.mxu0 %v897
        %1010 = vmatprep.subr.mxu0 0.0
        %1011 = vmatpush2.msra.mxu0 0.0
        %1012 = vmatprep.subr.mxu0 0.0
        %1013 = vmatpush2.msra.mxu0 0.0
        %1014 = vmatprep.subr.mxu0 0.0
        %1015 = vmatpush2.msra.mxu0 0.0
        %1016 = vmatprep.subr.mxu0 0.0
        %1017 = vmatpush2.msra.mxu0 0.0
        %1018 = vmatprep.subr.mxu0 0.0
        %1019 = vmatpush2.msra.mxu0 0.0
        %1020 = vmatprep.subr.mxu0 0.0
        %1021 = vmatpush2.msra.mxu0 0.0
        %1022 = vmatprep.subr.mxu0 0.0
        %1023 = vmatpush2.msra.mxu0 0.0
        %1024 = vmatprep.subr.mxu0 0.0
        %1025 = vmatpush2.msra.mxu0 0.0
        %1026 = vmatprep.subr.mxu0 0.0
        %1027 = vmatpush2.msra.mxu0 0.0
        %1028 = vmatprep.subr.mxu0 0.0
        %1029 = vmatpush2.msra.mxu0 0.0
        %1030 = vmatprep.subr.mxu0 0.0
        %1031 = vmatpush2.msra.mxu0 0.0
        %1032 = vmatprep.subr.mxu0 0.0
        %1033 = vmatpush2.msra.mxu0 0.0
        %1034 = vmatprep.subr.mxu0 0.0
        %1035 = vmatpush2.msra.mxu0 0.0
        %1036 = vmatprep.subr.mxu0 0.0
        %1037 = vmatpush2.msra.mxu0 0.0
        %1038 = vmatprep.subr.mxu0 0.0
        %1039 = vmatpush2.msra.mxu0 0.0
        %1040 = vmatprep.subr.mxu0 0.0
        %1041 = vmatpush2.msra.mxu0 0.0
        %1042 = vmatprep.mubr.f32.mxu0 0.0
        %1043 = vmatmul.mubr.f32.gmra.mxu0 %v967
        %v1044 = vpop.f32.mrf.mxu0
        %v1045 = vadd.f32 %v948, %v1044
        %v1046 = vpop.f32.mrf.mxu0
        %v1047 = vadd.f32 %v948, %v1046
        %1048 = vmatprep.mubr.f32.mxu0 0.0
        %1049 = vmatmul.mubr.f32.gmra.mxu0 %v970
        %v1050 = vpop.f32.mrf.mxu0
        %v1051 = vadd.f32 %v953, %v1050
        %v1052 = vpop.f32.mrf.mxu0
        %v1053 = vadd.f32 %v953, %v1052
        %1054 = vmatprep.mubr.f32.mxu0 0.0
        %1055 = vmatmul.mubr.f32.gmra.mxu0 %v973
        %v1056 = vpop.f32.mrf.mxu0
        %v1057 = vadd.f32 %v958, %v1056
        %v1058 = vpop.f32.mrf.mxu0
        %v1059 = vadd.f32 %v958, %v1058
        %1060 = vmatprep.mubr.f32.mxu0 0.0
        %1061 = vmatmul.mubr.f32.gmra.mxu0 %v976
        %v1062 = vpop.f32.mrf.mxu0
        %v1063 = vadd.f32 %v963, %v1062
        %v1064 = vpop.f32.mrf.mxu0
        %v1065 = vadd.f32 %v963, %v1064
        %1066 = vdwg.mxu0
        %1067 = vmatprep.subr.mxu0 0.0
        %1068 = vmatpush1.msra.mxu0 0.0
        %1069 = vmatprep.subr.mxu0 0.0
        %1070 = vmatpush1.msra.mxu0 0.0
        %1071 = vmatprep.subr.mxu0 0.0
        %1072 = vmatpush1.msra.mxu0 0.0
        %1073 = vmatprep.subr.mxu0 0.0
        %1074 = vmatpush1.msra.mxu0 0.0
        %1075 = vmatprep.subr.mxu0 0.0
        %1076 = vmatpush1.msra.mxu0 0.0
        %1077 = vmatprep.subr.mxu0 0.0
        %1078 = vmatpush1.msra.mxu0 0.0
        %1079 = vmatprep.subr.mxu0 0.0
        %1080 = vmatpush1.msra.mxu0 0.0
        %1081 = vmatprep.subr.mxu0 0.0
        %1082 = vmatpush1.msra.mxu0 0.0
        %1083 = vmatprep.subr.mxu0 0.0
        %1084 = vmatpush1.msra.mxu0 0.0
        %1085 = vmatprep.subr.mxu0 0.0
        %1086 = vmatpush1.msra.mxu0 0.0
        %1087 = vmatprep.subr.mxu0 0.0
        %1088 = vmatpush1.msra.mxu0 0.0
        %1089 = vmatprep.subr.mxu0 0.0
        %1090 = vmatpush1.msra.mxu0 0.0
        %1091 = vmatprep.subr.mxu0 %v930
        %1092 = vmatpush1.msra.mxu0 %v929
        %1093 = vmatprep.subr.mxu0 %v920
        %1094 = vmatpush1.msra.mxu0 %v919
        %1095 = vmatprep.subr.mxu0 %v910
        %1096 = vmatpush1.msra.mxu0 %v909
        %1097 = vmatprep.subr.mxu0 %v900
        %1098 = vmatpush1.msra.mxu0 %v899
        %1099 = vmatprep.subr.mxu0 0.0
        %1100 = vmatpush2.msra.mxu0 0.0
        %1101 = vmatprep.subr.mxu0 0.0
        %1102 = vmatpush2.msra.mxu0 0.0
        %1103 = vmatprep.subr.mxu0 0.0
        %1104 = vmatpush2.msra.mxu0 0.0
        %1105 = vmatprep.subr.mxu0 0.0
        %1106 = vmatpush2.msra.mxu0 0.0
        %1107 = vmatprep.subr.mxu0 0.0
        %1108 = vmatpush2.msra.mxu0 0.0
        %1109 = vmatprep.subr.mxu0 0.0
        %1110 = vmatpush2.msra.mxu0 0.0
        %1111 = vmatprep.subr.mxu0 0.0
        %1112 = vmatpush2.msra.mxu0 0.0
        %1113 = vmatprep.subr.mxu0 0.0
        %1114 = vmatpush2.msra.mxu0 0.0
        %1115 = vmatprep.subr.mxu0 0.0
        %1116 = vmatpush2.msra.mxu0 0.0
        %1117 = vmatprep.subr.mxu0 0.0
        %1118 = vmatpush2.msra.mxu0 0.0
        %1119 = vmatprep.subr.mxu0 0.0
        %1120 = vmatpush2.msra.mxu0 0.0
        %1121 = vmatprep.subr.mxu0 0.0
        %1122 = vmatpush2.msra.mxu0 0.0
        %1123 = vmatprep.subr.mxu0 0.0
        %1124 = vmatpush2.msra.mxu0 0.0
        %1125 = vmatprep.subr.mxu0 0.0
        %1126 = vmatpush2.msra.mxu0 0.0
        %1127 = vmatprep.subr.mxu0 0.0
        %1128 = vmatpush2.msra.mxu0 0.0
        %1129 = vmatprep.subr.mxu0 0.0
        %1130 = vmatpush2.msra.mxu0 0.0
        %1131 = vmatprep.mubr.f32.mxu0 0.0
        %1132 = vmatmul.mubr.f32.gmra.mxu0 %v967
        %v1133 = vpop.f32.mrf.mxu0
        %v1134 = vadd.f32 %v948, %v1133
        %v1135 = vpop.f32.mrf.mxu0
        %v1136 = vadd.f32 %v948, %v1135
        %1137 = vmatprep.mubr.f32.mxu0 0.0
        %1138 = vmatmul.mubr.f32.gmra.mxu0 %v970
        %v1139 = vpop.f32.mrf.mxu0
        %v1140 = vadd.f32 %v953, %v1139
        %v1141 = vpop.f32.mrf.mxu0
        %v1142 = vadd.f32 %v953, %v1141
        %1143 = vmatprep.mubr.f32.mxu0 0.0
        %1144 = vmatmul.mubr.f32.gmra.mxu0 %v973
        %v1145 = vpop.f32.mrf.mxu0
        %v1146 = vadd.f32 %v958, %v1145
        %v1147 = vpop.f32.mrf.mxu0
        %v1148 = vadd.f32 %v958, %v1147
        %1149 = vmatprep.mubr.f32.mxu0 0.0
        %1150 = vmatmul.mubr.f32.gmra.mxu0 %v976
        %v1151 = vpop.f32.mrf.mxu0
        %v1152 = vadd.f32 %v963, %v1151
        %v1153 = vpop.f32.mrf.mxu0
        %v1154 = vadd.f32 %v963, %v1153
        %1155 = vdwg.mxu0
        %1156 = vmatprep.subr.mxu0 0.0
        %1157 = vmatpush1.msra.mxu0 0.0
        %1158 = vmatprep.subr.mxu0 0.0
        %1159 = vmatpush1.msra.mxu0 0.0
        %1160 = vmatprep.subr.mxu0 0.0
        %1161 = vmatpush1.msra.mxu0 0.0
        %1162 = vmatprep.subr.mxu0 0.0
        %1163 = vmatpush1.msra.mxu0 0.0
        %1164 = vmatprep.subr.mxu0 0.0
        %1165 = vmatpush1.msra.mxu0 0.0
        %1166 = vmatprep.subr.mxu0 0.0
        %1167 = vmatpush1.msra.mxu0 0.0
        %1168 = vmatprep.subr.mxu0 0.0
        %1169 = vmatpush1.msra.mxu0 0.0
        %1170 = vmatprep.subr.mxu0 0.0
        %1171 = vmatpush1.msra.mxu0 0.0
        %1172 = vmatprep.subr.mxu0 0.0
        %1173 = vmatpush1.msra.mxu0 0.0
        %1174 = vmatprep.subr.mxu0 0.0
        %1175 = vmatpush1.msra.mxu0 0.0
        %1176 = vmatprep.subr.mxu0 0.0
        %1177 = vmatpush1.msra.mxu0 0.0
        %1178 = vmatprep.subr.mxu0 0.0
        %1179 = vmatpush1.msra.mxu0 0.0
        %1180 = vmatprep.subr.mxu0 %v932
        %1181 = vmatpush1.msra.mxu0 %v931
        %1182 = vmatprep.subr.mxu0 %v922
        %1183 = vmatpush1.msra.mxu0 %v921
        %1184 = vmatprep.subr.mxu0 %v912
        %1185 = vmatpush1.msra.mxu0 %v911
        %1186 = vmatprep.subr.mxu0 %v902
        %1187 = vmatpush1.msra.mxu0 %v901
        %1188 = vmatprep.subr.mxu0 0.0
        %1189 = vmatpush2.msra.mxu0 0.0
        %1190 = vmatprep.subr.mxu0 0.0
        %1191 = vmatpush2.msra.mxu0 0.0
        %1192 = vmatprep.subr.mxu0 0.0
        %1193 = vmatpush2.msra.mxu0 0.0
        %1194 = vmatprep.subr.mxu0 0.0
        %1195 = vmatpush2.msra.mxu0 0.0
        %1196 = vmatprep.subr.mxu0 0.0
        %1197 = vmatpush2.msra.mxu0 0.0
        %1198 = vmatprep.subr.mxu0 0.0
        %1199 = vmatpush2.msra.mxu0 0.0
        %1200 = vmatprep.subr.mxu0 0.0
        %1201 = vmatpush2.msra.mxu0 0.0
        %1202 = vmatprep.subr.mxu0 0.0
        %1203 = vmatpush2.msra.mxu0 0.0
        %1204 = vmatprep.subr.mxu0 0.0
        %1205 = vmatpush2.msra.mxu0 0.0
        %1206 = vmatprep.subr.mxu0 0.0
        %1207 = vmatpush2.msra.mxu0 0.0
        %1208 = vmatprep.subr.mxu0 0.0
        %1209 = vmatpush2.msra.mxu0 0.0
        %1210 = vmatprep.subr.mxu0 0.0
        %1211 = vmatpush2.msra.mxu0 0.0
        %1212 = vmatprep.subr.mxu0 0.0
        %1213 = vmatpush2.msra.mxu0 0.0
        %1214 = vmatprep.subr.mxu0 0.0
        %1215 = vmatpush2.msra.mxu0 0.0
        %1216 = vmatprep.subr.mxu0 0.0
        %1217 = vmatpush2.msra.mxu0 0.0
        %1218 = vmatprep.subr.mxu0 0.0
        %1219 = vmatpush2.msra.mxu0 0.0
        %1220 = vmatprep.mubr.f32.mxu0 0.0
        %1221 = vmatmul.mubr.f32.gmra.mxu0 %v967
        %v1222 = vpop.f32.mrf.mxu0
        %v1223 = vadd.f32 %v948, %v1222
        %v1224 = vpop.f32.mrf.mxu0
        %v1225 = vadd.f32 %v948, %v1224
        %1226 = vmatprep.mubr.f32.mxu0 0.0
        %1227 = vmatmul.mubr.f32.gmra.mxu0 %v970
        %v1228 = vpop.f32.mrf.mxu0
        %v1229 = vadd.f32 %v953, %v1228
        %v1230 = vpop.f32.mrf.mxu0
        %v1231 = vadd.f32 %v953, %v1230
        %1232 = vmatprep.mubr.f32.mxu0 0.0
        %1233 = vmatmul.mubr.f32.gmra.mxu0 %v973
        %v1234 = vpop.f32.mrf.mxu0
        %v1235 = vadd.f32 %v958, %v1234
        %v1236 = vpop.f32.mrf.mxu0
        %v1237 = vadd.f32 %v958, %v1236
        %1238 = vmatprep.mubr.f32.mxu0 0.0
        %1239 = vmatmul.mubr.f32.gmra.mxu0 %v976
        %v1240 = vpop.f32.mrf.mxu0
        %v1241 = vadd.f32 %v963, %v1240
        %v1242 = vpop.f32.mrf.mxu0
        %v1243 = vadd.f32 %v963, %v1242
        %1244 = vdwg.mxu0
        %1245 = vmatprep.subr.mxu0 0.0
        %1246 = vmatpush1.msra.mxu0 0.0
        %1247 = vmatprep.subr.mxu0 0.0
        %1248 = vmatpush1.msra.mxu0 0.0
        %1249 = vmatprep.subr.mxu0 0.0
        %1250 = vmatpush1.msra.mxu0 0.0
        %1251 = vmatprep.subr.mxu0 0.0
        %1252 = vmatpush1.msra.mxu0 0.0
        %1253 = vmatprep.subr.mxu0 0.0
        %1254 = vmatpush1.msra.mxu0 0.0
        %1255 = vmatprep.subr.mxu0 0.0
        %1256 = vmatpush1.msra.mxu0 0.0
        %1257 = vmatprep.subr.mxu0 0.0
        %1258 = vmatpush1.msra.mxu0 0.0
        %1259 = vmatprep.subr.mxu0 0.0
        %1260 = vmatpush1.msra.mxu0 0.0
        %1261 = vmatprep.subr.mxu0 0.0
        %1262 = vmatpush1.msra.mxu0 0.0
        %1263 = vmatprep.subr.mxu0 0.0
        %1264 = vmatpush1.msra.mxu0 0.0
        %1265 = vmatprep.subr.mxu0 0.0
        %1266 = vmatpush1.msra.mxu0 0.0
        %1267 = vmatprep.subr.mxu0 0.0
        %1268 = vmatpush1.msra.mxu0 0.0
        %1269 = vmatprep.subr.mxu0 %v934
        %1270 = vmatpush1.msra.mxu0 %v933
        %1271 = vmatprep.subr.mxu0 %v924
        %1272 = vmatpush1.msra.mxu0 %v923
        %1273 = vmatprep.subr.mxu0 %v914
        %1274 = vmatpush1.msra.mxu0 %v913
        %1275 = vmatprep.subr.mxu0 %v904
        %1276 = vmatpush1.msra.mxu0 %v903
        %1277 = vmatprep.subr.mxu0 0.0
        %1278 = vmatpush2.msra.mxu0 0.0
        %1279 = vmatprep.subr.mxu0 0.0
        %1280 = vmatpush2.msra.mxu0 0.0
        %1281 = vmatprep.subr.mxu0 0.0
        %1282 = vmatpush2.msra.mxu0 0.0
        %1283 = vmatprep.subr.mxu0 0.0
        %1284 = vmatpush2.msra.mxu0 0.0
        %1285 = vmatprep.subr.mxu0 0.0
        %1286 = vmatpush2.msra.mxu0 0.0
        %1287 = vmatprep.subr.mxu0 0.0
        %1288 = vmatpush2.msra.mxu0 0.0
        %1289 = vmatprep.subr.mxu0 0.0
        %1290 = vmatpush2.msra.mxu0 0.0
        %1291 = vmatprep.subr.mxu0 0.0
        %1292 = vmatpush2.msra.mxu0 0.0
        %1293 = vmatprep.subr.mxu0 0.0
        %1294 = vmatpush2.msra.mxu0 0.0
        %1295 = vmatprep.subr.mxu0 0.0
        %1296 = vmatpush2.msra.mxu0 0.0
        %1297 = vmatprep.subr.mxu0 0.0
        %1298 = vmatpush2.msra.mxu0 0.0
        %1299 = vmatprep.subr.mxu0 0.0
        %1300 = vmatpush2.msra.mxu0 0.0
        %1301 = vmatprep.subr.mxu0 0.0
        %1302 = vmatpush2.msra.mxu0 0.0
        %1303 = vmatprep.subr.mxu0 0.0
        %1304 = vmatpush2.msra.mxu0 0.0
        %1305 = vmatprep.subr.mxu0 0.0
        %1306 = vmatpush2.msra.mxu0 0.0
        %1307 = vmatprep.subr.mxu0 0.0
        %1308 = vmatpush2.msra.mxu0 0.0
        %1309 = vmatprep.mubr.f32.mxu0 0.0
        %1310 = vmatmul.mubr.f32.gmra.mxu0 %v967
        %v1311 = vpop.f32.mrf.mxu0
        %v1312 = vadd.f32 %v948, %v1311
        %v1313 = vpop.f32.mrf.mxu0
        %v1314 = vadd.f32 %v948, %v1313
        %1315 = vmatprep.mubr.f32.mxu0 0.0
        %1316 = vmatmul.mubr.f32.gmra.mxu0 %v970
        %v1317 = vpop.f32.mrf.mxu0
        %v1318 = vadd.f32 %v953, %v1317
        %v1319 = vpop.f32.mrf.mxu0
        %v1320 = vadd.f32 %v953, %v1319
        %1321 = vmatprep.mubr.f32.mxu0 0.0
        %1322 = vmatmul.mubr.f32.gmra.mxu0 %v973
        %v1323 = vpop.f32.mrf.mxu0
        %v1324 = vadd.f32 %v958, %v1323
        %v1325 = vpop.f32.mrf.mxu0
        %v1326 = vadd.f32 %v958, %v1325
        %1327 = vmatprep.mubr.f32.mxu0 0.0
        %1328 = vmatmul.mubr.f32.gmra.mxu0 %v976
        %v1329 = vpop.f32.mrf.mxu0
        %v1330 = vadd.f32 %v963, %v1329
        %v1331 = vpop.f32.mrf.mxu0
        %v1332 = vadd.f32 %v963, %v1331
        %1333 = vdwg.mxu0
        %1334 = vmatprep.subr.mxu0 0.0
        %1335 = vmatpush1.msra.mxu0 0.0
        %1336 = vmatprep.subr.mxu0 0.0
        %1337 = vmatpush1.msra.mxu0 0.0
        %1338 = vmatprep.subr.mxu0 0.0
        %1339 = vmatpush1.msra.mxu0 0.0
        %1340 = vmatprep.subr.mxu0 0.0
        %1341 = vmatpush1.msra.mxu0 0.0
        %1342 = vmatprep.subr.mxu0 0.0
        %1343 = vmatpush1.msra.mxu0 0.0
        %1344 = vmatprep.subr.mxu0 0.0
        %1345 = vmatpush1.msra.mxu0 0.0
        %1346 = vmatprep.subr.mxu0 0.0
        %1347 = vmatpush1.msra.mxu0 0.0
        %1348 = vmatprep.subr.mxu0 0.0
        %1349 = vmatpush1.msra.mxu0 0.0
        %1350 = vmatprep.subr.mxu0 0.0
        %1351 = vmatpush1.msra.mxu0 0.0
        %1352 = vmatprep.subr.mxu0 0.0
        %1353 = vmatpush1.msra.mxu0 0.0
        %1354 = vmatprep.subr.mxu0 0.0
        %1355 = vmatpush1.msra.mxu0 0.0
        %1356 = vmatprep.subr.mxu0 0.0
        %1357 = vmatpush1.msra.mxu0 0.0
        %1358 = vmatprep.subr.mxu0 %v936
        %1359 = vmatpush1.msra.mxu0 %v935
        %1360 = vmatprep.subr.mxu0 %v926
        %1361 = vmatpush1.msra.mxu0 %v925
        %1362 = vmatprep.subr.mxu0 %v916
        %1363 = vmatpush1.msra.mxu0 %v915
        %1364 = vmatprep.subr.mxu0 %v906
        %1365 = vmatpush1.msra.mxu0 %v905
        %1366 = vmatprep.subr.mxu0 0.0
        %1367 = vmatpush2.msra.mxu0 0.0
        %1368 = vmatprep.subr.mxu0 0.0
        %1369 = vmatpush2.msra.mxu0 0.0
        %1370 = vmatprep.subr.mxu0 0.0
        %1371 = vmatpush2.msra.mxu0 0.0
        %1372 = vmatprep.subr.mxu0 0.0
        %1373 = vmatpush2.msra.mxu0 0.0
        %1374 = vmatprep.subr.mxu0 0.0
        %1375 = vmatpush2.msra.mxu0 0.0
        %1376 = vmatprep.subr.mxu0 0.0
        %1377 = vmatpush2.msra.mxu0 0.0
        %1378 = vmatprep.subr.mxu0 0.0
        %1379 = vmatpush2.msra.mxu0 0.0
        %1380 = vmatprep.subr.mxu0 0.0
        %1381 = vmatpush2.msra.mxu0 0.0
        %1382 = vmatprep.subr.mxu0 0.0
        %1383 = vmatpush2.msra.mxu0 0.0
        %1384 = vmatprep.subr.mxu0 0.0
        %1385 = vmatpush2.msra.mxu0 0.0
        %1386 = vmatprep.subr.mxu0 0.0
        %1387 = vmatpush2.msra.mxu0 0.0
        %1388 = vmatprep.subr.mxu0 0.0
        %1389 = vmatpush2.msra.mxu0 0.0
        %1390 = vmatprep.subr.mxu0 0.0
        %1391 = vmatpush2.msra.mxu0 0.0
        %1392 = vmatprep.subr.mxu0 0.0
        %1393 = vmatpush2.msra.mxu0 0.0
        %1394 = vmatprep.subr.mxu0 0.0
        %1395 = vmatpush2.msra.mxu0 0.0
        %1396 = vmatprep.subr.mxu0 0.0
        %1397 = vmatpush2.msra.mxu0 0.0
        %1398 = vmatprep.mubr.f32.mxu0 0.0
        %1399 = vmatmul.mubr.f32.gmra.mxu0 %v967
        %v1400 = vpop.f32.mrf.mxu0
        %v1401 = vadd.f32 %v948, %v1400
        %v1402 = vpop.f32.mrf.mxu0
        %v1403 = vadd.f32 %v948, %v1402
        %1404 = vmatprep.mubr.f32.mxu0 0.0
        %1405 = vmatmul.mubr.f32.gmra.mxu0 %v970
        %v1406 = vpop.f32.mrf.mxu0
        %v1407 = vadd.f32 %v953, %v1406
        %v1408 = vpop.f32.mrf.mxu0
        %v1409 = vadd.f32 %v953, %v1408
        %1410 = vmatprep.mubr.f32.mxu0 0.0
        %1411 = vmatmul.mubr.f32.gmra.mxu0 %v973
        %v1412 = vpop.f32.mrf.mxu0
        %v1413 = vadd.f32 %v958, %v1412
        %v1414 = vpop.f32.mrf.mxu0
        %v1415 = vadd.f32 %v958, %v1414
        %1416 = vmatprep.mubr.f32.mxu0 0.0
        %1417 = vmatmul.mubr.f32.gmra.mxu0 %v976
        %v1418 = vpop.f32.mrf.mxu0
        %v1419 = vadd.f32 %v963, %v1418
        %v1420 = vpop.f32.mrf.mxu0
        %v1421 = vadd.f32 %v963, %v1420
        %1422 = vdwg.mxu0
        %v1423 = vtanh.pop %v1045
        %v1424 = vtanh.pop %v1047
        %v1425 = vtanh.pop %v1134
        %v1426 = vtanh.pop %v1136
        %v1427 = vtanh.pop %v1223
        %v1428 = vtanh.pop %v1225
        %v1429 = vtanh.pop %v1312
        %v1430 = vtanh.pop %v1314
        %v1431 = vtanh.pop %v1401
        %v1432 = vtanh.pop %v1403
        %v1433 = vtanh.pop %v1051
        %v1434 = vtanh.pop %v1053
        %v1435 = vtanh.pop %v1140
        %v1436 = vtanh.pop %v1142
        %v1437 = vtanh.pop %v1229
        %v1438 = vtanh.pop %v1231
        %v1439 = vtanh.pop %v1318
        %v1440 = vtanh.pop %v1320
        %v1441 = vtanh.pop %v1407
        %v1442 = vtanh.pop %v1409
        %v1443 = vtanh.pop %v1057
        %v1444 = vtanh.pop %v1059
        %v1445 = vtanh.pop %v1146
        %v1446 = vtanh.pop %v1148
        %v1447 = vtanh.pop %v1235
        %v1448 = vtanh.pop %v1237
        %v1449 = vtanh.pop %v1324
        %v1450 = vtanh.pop %v1326
        %v1451 = vtanh.pop %v1413
        %v1452 = vtanh.pop %v1415
        %v1453 = vtanh.pop %v1063
        %v1454 = vtanh.pop %v1065
        %v1455 = vtanh.pop %v1152
        %v1456 = vtanh.pop %v1154
        %v1457 = vtanh.pop %v1241
        %v1458 = vtanh.pop %v1243
        %v1459 = vtanh.pop %v1330
        %v1460 = vtanh.pop %v1332
        %v1461 = vtanh.pop %v1419
        %v1462 = vtanh.pop %v1421
        %s1463 = scalar_lea.vmem [#allocation3], 32
        %v1464 = vld [vmem:[%s1463] sm:$0xff]
        %v1465 = vld [vmem:[%s1463 + $0x8] sm:$0xff]
        %v1466 = vld [vmem:[%s1463 + $0x10] sm:$0xff]
        %v1467 = vld [vmem:[%s1463 + $0x18] sm:$0xff]
        %s1468 = scalar_lea.vmem %s4, 32
        %v1469 = vld [vmem:[%s1468] sm:$0xff]
        %v1470 = vld [vmem:[%s1468 + $0x8] sm:$0xff]
        %v1471 = vld [vmem:[%s1468 + $0x10] sm:$0xff]
        %v1472 = vld [vmem:[%s1468 + $0x18] sm:$0xff]
        %1474 = vset.pattern.permute.xlu0 0
        %1475 = vperm.xlu0 %1474, %v1469
        %v1476 = vpop.permute.xlu0 %1475
        %1479 = vset.pattern.permute.xlu0 0
        %1480 = vperm.xlu0 %1479, %v1470
        %v1481 = vpop.permute.xlu0 %1480
        %1484 = vset.pattern.permute.xlu0 0
        %1485 = vperm.xlu0 %1484, %v1471
        %v1486 = vpop.permute.xlu0 %1485
        %1489 = vset.pattern.permute.xlu0 0
        %1490 = vperm.xlu0 %1489, %v1472
        %v1491 = vpop.permute.xlu0 %1490
        %v1494 = vsel %vm965, %v1464, 0
        %v1497 = vsel %vm965, %v1465, 0
        %v1500 = vsel %vm965, %v1466, 0
        %v1503 = vsel %vm965, %v1467, 0
        %1505 = vmatprep.subr.mxu0 0.0
        %1506 = vmatpush1.msra.mxu0 0.0
        %1507 = vmatprep.subr.mxu0 0.0
        %1508 = vmatpush1.msra.mxu0 0.0
        %1509 = vmatprep.subr.mxu0 0.0
        %1510 = vmatpush1.msra.mxu0 0.0
        %1511 = vmatprep.subr.mxu0 0.0
        %1512 = vmatpush1.msra.mxu0 0.0
        %1513 = vmatprep.subr.mxu0 0.0
        %1514 = vmatpush1.msra.mxu0 0.0
        %1515 = vmatprep.subr.mxu0 0.0
        %1516 = vmatpush1.msra.mxu0 0.0
        %1517 = vmatprep.subr.mxu0 0.0
        %1518 = vmatpush1.msra.mxu0 0.0
        %1519 = vmatprep.subr.mxu0 0.0
        %1520 = vmatpush1.msra.mxu0 0.0
        %1521 = vmatprep.subr.mxu0 0.0
        %1522 = vmatpush1.msra.mxu0 0.0
        %1523 = vmatprep.subr.mxu0 0.0
        %1524 = vmatpush1.msra.mxu0 0.0
        %1525 = vmatprep.subr.mxu0 0.0
        %1526 = vmatpush1.msra.mxu0 0.0
        %1527 = vmatprep.subr.mxu0 0.0
        %1528 = vmatpush1.msra.mxu0 0.0
        %1529 = vmatprep.subr.mxu0 %v1454
        %1530 = vmatpush1.msra.mxu0 %v1453
        %1531 = vmatprep.subr.mxu0 %v1444
        %1532 = vmatpush1.msra.mxu0 %v1443
        %1533 = vmatprep.subr.mxu0 %v1434
        %1534 = vmatpush1.msra.mxu0 %v1433
        %1535 = vmatprep.subr.mxu0 %v1424
        %1536 = vmatpush1.msra.mxu0 %v1423
        %1537 = vmatprep.subr.mxu0 0.0
        %1538 = vmatpush2.msra.mxu0 0.0
        %1539 = vmatprep.subr.mxu0 0.0
        %1540 = vmatpush2.msra.mxu0 0.0
        %1541 = vmatprep.subr.mxu0 0.0
        %1542 = vmatpush2.msra.mxu0 0.0
        %1543 = vmatprep.subr.mxu0 0.0
        %1544 = vmatpush2.msra.mxu0 0.0
        %1545 = vmatprep.subr.mxu0 0.0
        %1546 = vmatpush2.msra.mxu0 0.0
        %1547 = vmatprep.subr.mxu0 0.0
        %1548 = vmatpush2.msra.mxu0 0.0
        %1549 = vmatprep.subr.mxu0 0.0
        %1550 = vmatpush2.msra.mxu0 0.0
        %1551 = vmatprep.subr.mxu0 0.0
        %1552 = vmatpush2.msra.mxu0 0.0
        %1553 = vmatprep.subr.mxu0 0.0
        %1554 = vmatpush2.msra.mxu0 0.0
        %1555 = vmatprep.subr.mxu0 0.0
        %1556 = vmatpush2.msra.mxu0 0.0
        %1557 = vmatprep.subr.mxu0 0.0
        %1558 = vmatpush2.msra.mxu0 0.0
        %1559 = vmatprep.subr.mxu0 0.0
        %1560 = vmatpush2.msra.mxu0 0.0
        %1561 = vmatprep.subr.mxu0 0.0
        %1562 = vmatpush2.msra.mxu0 0.0
        %1563 = vmatprep.subr.mxu0 0.0
        %1564 = vmatpush2.msra.mxu0 0.0
        %1565 = vmatprep.subr.mxu0 0.0
        %1566 = vmatpush2.msra.mxu0 0.0
        %1567 = vmatprep.subr.mxu0 0.0
        %1568 = vmatpush2.msra.mxu0 0.0
        %1569 = vmatprep.mubr.f32.mxu0 0.0
        %1570 = vmatmul.mubr.f32.gmra.mxu0 %v1494
        %v1571 = vpop.f32.mrf.mxu0
        %v1572 = vadd.f32 %v1476, %v1571
        %v1573 = vpop.f32.mrf.mxu0
        %v1574 = vadd.f32 %v1476, %v1573
        %1575 = vmatprep.mubr.f32.mxu0 0.0
        %1576 = vmatmul.mubr.f32.gmra.mxu0 %v1497
        %v1577 = vpop.f32.mrf.mxu0
        %v1578 = vadd.f32 %v1481, %v1577
        %v1579 = vpop.f32.mrf.mxu0
        %v1580 = vadd.f32 %v1481, %v1579
        %1581 = vmatprep.mubr.f32.mxu0 0.0
        %1582 = vmatmul.mubr.f32.gmra.mxu0 %v1500
        %v1583 = vpop.f32.mrf.mxu0
        %v1584 = vadd.f32 %v1486, %v1583
        %v1585 = vpop.f32.mrf.mxu0
        %v1586 = vadd.f32 %v1486, %v1585
        %1587 = vmatprep.mubr.f32.mxu0 0.0
        %1588 = vmatmul.mubr.f32.gmra.mxu0 %v1503
        %v1589 = vpop.f32.mrf.mxu0
        %v1590 = vadd.f32 %v1491, %v1589
        %v1591 = vpop.f32.mrf.mxu0
        %v1592 = vadd.f32 %v1491, %v1591
        %1593 = vdwg.mxu0
        %1594 = vmatprep.subr.mxu0 0.0
        %1595 = vmatpush1.msra.mxu0 0.0
        %1596 = vmatprep.subr.mxu0 0.0
        %1597 = vmatpush1.msra.mxu0 0.0
        %1598 = vmatprep.subr.mxu0 0.0
        %1599 = vmatpush1.msra.mxu0 0.0
        %1600 = vmatprep.subr.mxu0 0.0
        %1601 = vmatpush1.msra.mxu0 0.0
        %1602 = vmatprep.subr.mxu0 0.0
        %1603 = vmatpush1.msra.mxu0 0.0
        %1604 = vmatprep.subr.mxu0 0.0
        %1605 = vmatpush1.msra.mxu0 0.0
        %1606 = vmatprep.subr.mxu0 0.0
        %1607 = vmatpush1.msra.mxu0 0.0
        %1608 = vmatprep.subr.mxu0 0.0
        %1609 = vmatpush1.msra.mxu0 0.0
        %1610 = vmatprep.subr.mxu0 0.0
        %1611 = vmatpush1.msra.mxu0 0.0
        %1612 = vmatprep.subr.mxu0 0.0
        %1613 = vmatpush1.msra.mxu0 0.0
        %1614 = vmatprep.subr.mxu0 0.0
        %1615 = vmatpush1.msra.mxu0 0.0
        %1616 = vmatprep.subr.mxu0 0.0
        %1617 = vmatpush1.msra.mxu0 0.0
        %1618 = vmatprep.subr.mxu0 %v1456
        %1619 = vmatpush1.msra.mxu0 %v1455
        %1620 = vmatprep.subr.mxu0 %v1446
        %1621 = vmatpush1.msra.mxu0 %v1445
        %1622 = vmatprep.subr.mxu0 %v1436
        %1623 = vmatpush1.msra.mxu0 %v1435
        %1624 = vmatprep.subr.mxu0 %v1426
        %1625 = vmatpush1.msra.mxu0 %v1425
        %1626 = vmatprep.subr.mxu0 0.0
        %1627 = vmatpush2.msra.mxu0 0.0
        %1628 = vmatprep.subr.mxu0 0.0
        %1629 = vmatpush2.msra.mxu0 0.0
        %1630 = vmatprep.subr.mxu0 0.0
        %1631 = vmatpush2.msra.mxu0 0.0
        %1632 = vmatprep.subr.mxu0 0.0
        %1633 = vmatpush2.msra.mxu0 0.0
        %1634 = vmatprep.subr.mxu0 0.0
        %1635 = vmatpush2.msra.mxu0 0.0
        %1636 = vmatprep.subr.mxu0 0.0
        %1637 = vmatpush2.msra.mxu0 0.0
        %1638 = vmatprep.subr.mxu0 0.0
        %1639 = vmatpush2.msra.mxu0 0.0
        %1640 = vmatprep.subr.mxu0 0.0
        %1641 = vmatpush2.msra.mxu0 0.0
        %1642 = vmatprep.subr.mxu0 0.0
        %1643 = vmatpush2.msra.mxu0 0.0
        %1644 = vmatprep.subr.mxu0 0.0
        %1645 = vmatpush2.msra.mxu0 0.0
        %1646 = vmatprep.subr.mxu0 0.0
        %1647 = vmatpush2.msra.mxu0 0.0
        %1648 = vmatprep.subr.mxu0 0.0
        %1649 = vmatpush2.msra.mxu0 0.0
        %1650 = vmatprep.subr.mxu0 0.0
        %1651 = vmatpush2.msra.mxu0 0.0
        %1652 = vmatprep.subr.mxu0 0.0
        %1653 = vmatpush2.msra.mxu0 0.0
        %1654 = vmatprep.subr.mxu0 0.0
        %1655 = vmatpush2.msra.mxu0 0.0
        %1656 = vmatprep.subr.mxu0 0.0
        %1657 = vmatpush2.msra.mxu0 0.0
        %1658 = vmatprep.mubr.f32.mxu0 0.0
        %1659 = vmatmul.mubr.f32.gmra.mxu0 %v1494
        %v1660 = vpop.f32.mrf.mxu0
        %v1661 = vadd.f32 %v1476, %v1660
        %v1662 = vpop.f32.mrf.mxu0
        %v1663 = vadd.f32 %v1476, %v1662
        %1664 = vmatprep.mubr.f32.mxu0 0.0
        %1665 = vmatmul.mubr.f32.gmra.mxu0 %v1497
        %v1666 = vpop.f32.mrf.mxu0
        %v1667 = vadd.f32 %v1481, %v1666
        %v1668 = vpop.f32.mrf.mxu0
        %v1669 = vadd.f32 %v1481, %v1668
        %1670 = vmatprep.mubr.f32.mxu0 0.0
        %1671 = vmatmul.mubr.f32.gmra.mxu0 %v1500
        %v1672 = vpop.f32.mrf.mxu0
        %v1673 = vadd.f32 %v1486, %v1672
        %v1674 = vpop.f32.mrf.mxu0
        %v1675 = vadd.f32 %v1486, %v1674
        %1676 = vmatprep.mubr.f32.mxu0 0.0
        %1677 = vmatmul.mubr.f32.gmra.mxu0 %v1503
        %v1678 = vpop.f32.mrf.mxu0
        %v1679 = vadd.f32 %v1491, %v1678
        %v1680 = vpop.f32.mrf.mxu0
        %v1681 = vadd.f32 %v1491, %v1680
        %1682 = vdwg.mxu0
        %1683 = vmatprep.subr.mxu0 0.0
        %1684 = vmatpush1.msra.mxu0 0.0
        %1685 = vmatprep.subr.mxu0 0.0
        %1686 = vmatpush1.msra.mxu0 0.0
        %1687 = vmatprep.subr.mxu0 0.0
        %1688 = vmatpush1.msra.mxu0 0.0
        %1689 = vmatprep.subr.mxu0 0.0
        %1690 = vmatpush1.msra.mxu0 0.0
        %1691 = vmatprep.subr.mxu0 0.0
        %1692 = vmatpush1.msra.mxu0 0.0
        %1693 = vmatprep.subr.mxu0 0.0
        %1694 = vmatpush1.msra.mxu0 0.0
        %1695 = vmatprep.subr.mxu0 0.0
        %1696 = vmatpush1.msra.mxu0 0.0
        %1697 = vmatprep.subr.mxu0 0.0
        %1698 = vmatpush1.msra.mxu0 0.0
        %1699 = vmatprep.subr.mxu0 0.0
        %1700 = vmatpush1.msra.mxu0 0.0
        %1701 = vmatprep.subr.mxu0 0.0
        %1702 = vmatpush1.msra.mxu0 0.0
        %1703 = vmatprep.subr.mxu0 0.0
        %1704 = vmatpush1.msra.mxu0 0.0
        %1705 = vmatprep.subr.mxu0 0.0
        %1706 = vmatpush1.msra.mxu0 0.0
        %1707 = vmatprep.subr.mxu0 %v1458
        %1708 = vmatpush1.msra.mxu0 %v1457
        %1709 = vmatprep.subr.mxu0 %v1448
        %1710 = vmatpush1.msra.mxu0 %v1447
        %1711 = vmatprep.subr.mxu0 %v1438
        %1712 = vmatpush1.msra.mxu0 %v1437
        %1713 = vmatprep.subr.mxu0 %v1428
        %1714 = vmatpush1.msra.mxu0 %v1427
        %1715 = vmatprep.subr.mxu0 0.0
        %1716 = vmatpush2.msra.mxu0 0.0
        %1717 = vmatprep.subr.mxu0 0.0
        %1718 = vmatpush2.msra.mxu0 0.0
        %1719 = vmatprep.subr.mxu0 0.0
        %1720 = vmatpush2.msra.mxu0 0.0
        %1721 = vmatprep.subr.mxu0 0.0
        %1722 = vmatpush2.msra.mxu0 0.0
        %1723 = vmatprep.subr.mxu0 0.0
        %1724 = vmatpush2.msra.mxu0 0.0
        %1725 = vmatprep.subr.mxu0 0.0
        %1726 = vmatpush2.msra.mxu0 0.0
        %1727 = vmatprep.subr.mxu0 0.0
        %1728 = vmatpush2.msra.mxu0 0.0
        %1729 = vmatprep.subr.mxu0 0.0
        %1730 = vmatpush2.msra.mxu0 0.0
        %1731 = vmatprep.subr.mxu0 0.0
        %1732 = vmatpush2.msra.mxu0 0.0
        %1733 = vmatprep.subr.mxu0 0.0
        %1734 = vmatpush2.msra.mxu0 0.0
        %1735 = vmatprep.subr.mxu0 0.0
        %1736 = vmatpush2.msra.mxu0 0.0
        %1737 = vmatprep.subr.mxu0 0.0
        %1738 = vmatpush2.msra.mxu0 0.0
        %1739 = vmatprep.subr.mxu0 0.0
        %1740 = vmatpush2.msra.mxu0 0.0
        %1741 = vmatprep.subr.mxu0 0.0
        %1742 = vmatpush2.msra.mxu0 0.0
        %1743 = vmatprep.subr.mxu0 0.0
        %1744 = vmatpush2.msra.mxu0 0.0
        %1745 = vmatprep.subr.mxu0 0.0
        %1746 = vmatpush2.msra.mxu0 0.0
        %1747 = vmatprep.mubr.f32.mxu0 0.0
        %1748 = vmatmul.mubr.f32.gmra.mxu0 %v1494
        %v1749 = vpop.f32.mrf.mxu0
        %v1750 = vadd.f32 %v1476, %v1749
        %v1751 = vpop.f32.mrf.mxu0
        %v1752 = vadd.f32 %v1476, %v1751
        %1753 = vmatprep.mubr.f32.mxu0 0.0
        %1754 = vmatmul.mubr.f32.gmra.mxu0 %v1497
        %v1755 = vpop.f32.mrf.mxu0
        %v1756 = vadd.f32 %v1481, %v1755
        %v1757 = vpop.f32.mrf.mxu0
        %v1758 = vadd.f32 %v1481, %v1757
        %1759 = vmatprep.mubr.f32.mxu0 0.0
        %1760 = vmatmul.mubr.f32.gmra.mxu0 %v1500
        %v1761 = vpop.f32.mrf.mxu0
        %v1762 = vadd.f32 %v1486, %v1761
        %v1763 = vpop.f32.mrf.mxu0
        %v1764 = vadd.f32 %v1486, %v1763
        %1765 = vmatprep.mubr.f32.mxu0 0.0
        %1766 = vmatmul.mubr.f32.gmra.mxu0 %v1503
        %v1767 = vpop.f32.mrf.mxu0
        %v1768 = vadd.f32 %v1491, %v1767
        %v1769 = vpop.f32.mrf.mxu0
        %v1770 = vadd.f32 %v1491, %v1769
        %1771 = vdwg.mxu0
        %1772 = vmatprep.subr.mxu0 0.0
        %1773 = vmatpush1.msra.mxu0 0.0
        %1774 = vmatprep.subr.mxu0 0.0
        %1775 = vmatpush1.msra.mxu0 0.0
        %1776 = vmatprep.subr.mxu0 0.0
        %1777 = vmatpush1.msra.mxu0 0.0
        %1778 = vmatprep.subr.mxu0 0.0
        %1779 = vmatpush1.msra.mxu0 0.0
        %1780 = vmatprep.subr.mxu0 0.0
        %1781 = vmatpush1.msra.mxu0 0.0
        %1782 = vmatprep.subr.mxu0 0.0
        %1783 = vmatpush1.msra.mxu0 0.0
        %1784 = vmatprep.subr.mxu0 0.0
        %1785 = vmatpush1.msra.mxu0 0.0
        %1786 = vmatprep.subr.mxu0 0.0
        %1787 = vmatpush1.msra.mxu0 0.0
        %1788 = vmatprep.subr.mxu0 0.0
        %1789 = vmatpush1.msra.mxu0 0.0
        %1790 = vmatprep.subr.mxu0 0.0
        %1791 = vmatpush1.msra.mxu0 0.0
        %1792 = vmatprep.subr.mxu0 0.0
        %1793 = vmatpush1.msra.mxu0 0.0
        %1794 = vmatprep.subr.mxu0 0.0
        %1795 = vmatpush1.msra.mxu0 0.0
        %1796 = vmatprep.subr.mxu0 %v1460
        %1797 = vmatpush1.msra.mxu0 %v1459
        %1798 = vmatprep.subr.mxu0 %v1450
        %1799 = vmatpush1.msra.mxu0 %v1449
        %1800 = vmatprep.subr.mxu0 %v1440
        %1801 = vmatpush1.msra.mxu0 %v1439
        %1802 = vmatprep.subr.mxu0 %v1430
        %1803 = vmatpush1.msra.mxu0 %v1429
        %1804 = vmatprep.subr.mxu0 0.0
        %1805 = vmatpush2.msra.mxu0 0.0
        %1806 = vmatprep.subr.mxu0 0.0
        %1807 = vmatpush2.msra.mxu0 0.0
        %1808 = vmatprep.subr.mxu0 0.0
        %1809 = vmatpush2.msra.mxu0 0.0
        %1810 = vmatprep.subr.mxu0 0.0
        %1811 = vmatpush2.msra.mxu0 0.0
        %1812 = vmatprep.subr.mxu0 0.0
        %1813 = vmatpush2.msra.mxu0 0.0
        %1814 = vmatprep.subr.mxu0 0.0
        %1815 = vmatpush2.msra.mxu0 0.0
        %1816 = vmatprep.subr.mxu0 0.0
        %1817 = vmatpush2.msra.mxu0 0.0
        %1818 = vmatprep.subr.mxu0 0.0
        %1819 = vmatpush2.msra.mxu0 0.0
        %1820 = vmatprep.subr.mxu0 0.0
        %1821 = vmatpush2.msra.mxu0 0.0
        %1822 = vmatprep.subr.mxu0 0.0
        %1823 = vmatpush2.msra.mxu0 0.0
        %1824 = vmatprep.subr.mxu0 0.0
        %1825 = vmatpush2.msra.mxu0 0.0
        %1826 = vmatprep.subr.mxu0 0.0
        %1827 = vmatpush2.msra.mxu0 0.0
        %1828 = vmatprep.subr.mxu0 0.0
        %1829 = vmatpush2.msra.mxu0 0.0
        %1830 = vmatprep.subr.mxu0 0.0
        %1831 = vmatpush2.msra.mxu0 0.0
        %1832 = vmatprep.subr.mxu0 0.0
        %1833 = vmatpush2.msra.mxu0 0.0
        %1834 = vmatprep.subr.mxu0 0.0
        %1835 = vmatpush2.msra.mxu0 0.0
        %1836 = vmatprep.mubr.f32.mxu0 0.0
        %1837 = vmatmul.mubr.f32.gmra.mxu0 %v1494
        %v1838 = vpop.f32.mrf.mxu0
        %v1839 = vadd.f32 %v1476, %v1838
        %v1840 = vpop.f32.mrf.mxu0
        %v1841 = vadd.f32 %v1476, %v1840
        %1842 = vmatprep.mubr.f32.mxu0 0.0
        %1843 = vmatmul.mubr.f32.gmra.mxu0 %v1497
        %v1844 = vpop.f32.mrf.mxu0
        %v1845 = vadd.f32 %v1481, %v1844
        %v1846 = vpop.f32.mrf.mxu0
        %v1847 = vadd.f32 %v1481, %v1846
        %1848 = vmatprep.mubr.f32.mxu0 0.0
        %1849 = vmatmul.mubr.f32.gmra.mxu0 %v1500
        %v1850 = vpop.f32.mrf.mxu0
        %v1851 = vadd.f32 %v1486, %v1850
        %v1852 = vpop.f32.mrf.mxu0
        %v1853 = vadd.f32 %v1486, %v1852
        %1854 = vmatprep.mubr.f32.mxu0 0.0
        %1855 = vmatmul.mubr.f32.gmra.mxu0 %v1503
        %v1856 = vpop.f32.mrf.mxu0
        %v1857 = vadd.f32 %v1491, %v1856
        %v1858 = vpop.f32.mrf.mxu0
        %v1859 = vadd.f32 %v1491, %v1858
        %1860 = vdwg.mxu0
        %1861 = vmatprep.subr.mxu0 0.0
        %1862 = vmatpush1.msra.mxu0 0.0
        %1863 = vmatprep.subr.mxu0 0.0
        %1864 = vmatpush1.msra.mxu0 0.0
        %1865 = vmatprep.subr.mxu0 0.0
        %1866 = vmatpush1.msra.mxu0 0.0
        %1867 = vmatprep.subr.mxu0 0.0
        %1868 = vmatpush1.msra.mxu0 0.0
        %1869 = vmatprep.subr.mxu0 0.0
        %1870 = vmatpush1.msra.mxu0 0.0
        %1871 = vmatprep.subr.mxu0 0.0
        %1872 = vmatpush1.msra.mxu0 0.0
        %1873 = vmatprep.subr.mxu0 0.0
        %1874 = vmatpush1.msra.mxu0 0.0
        %1875 = vmatprep.subr.mxu0 0.0
        %1876 = vmatpush1.msra.mxu0 0.0
        %1877 = vmatprep.subr.mxu0 0.0
        %1878 = vmatpush1.msra.mxu0 0.0
        %1879 = vmatprep.subr.mxu0 0.0
        %1880 = vmatpush1.msra.mxu0 0.0
        %1881 = vmatprep.subr.mxu0 0.0
        %1882 = vmatpush1.msra.mxu0 0.0
        %1883 = vmatprep.subr.mxu0 0.0
        %1884 = vmatpush1.msra.mxu0 0.0
        %1885 = vmatprep.subr.mxu0 %v1462
        %1886 = vmatpush1.msra.mxu0 %v1461
        %1887 = vmatprep.subr.mxu0 %v1452
        %1888 = vmatpush1.msra.mxu0 %v1451
        %1889 = vmatprep.subr.mxu0 %v1442
        %1890 = vmatpush1.msra.mxu0 %v1441
        %1891 = vmatprep.subr.mxu0 %v1432
        %1892 = vmatpush1.msra.mxu0 %v1431
        %1893 = vmatprep.subr.mxu0 0.0
        %1894 = vmatpush2.msra.mxu0 0.0
        %1895 = vmatprep.subr.mxu0 0.0
        %1896 = vmatpush2.msra.mxu0 0.0
        %1897 = vmatprep.subr.mxu0 0.0
        %1898 = vmatpush2.msra.mxu0 0.0
        %1899 = vmatprep.subr.mxu0 0.0
        %1900 = vmatpush2.msra.mxu0 0.0
        %1901 = vmatprep.subr.mxu0 0.0
        %1902 = vmatpush2.msra.mxu0 0.0
        %1903 = vmatprep.subr.mxu0 0.0
        %1904 = vmatpush2.msra.mxu0 0.0
        %1905 = vmatprep.subr.mxu0 0.0
        %1906 = vmatpush2.msra.mxu0 0.0
        %1907 = vmatprep.subr.mxu0 0.0
        %1908 = vmatpush2.msra.mxu0 0.0
        %1909 = vmatprep.subr.mxu0 0.0
        %1910 = vmatpush2.msra.mxu0 0.0
        %1911 = vmatprep.subr.mxu0 0.0
        %1912 = vmatpush2.msra.mxu0 0.0
        %1913 = vmatprep.subr.mxu0 0.0
        %1914 = vmatpush2.msra.mxu0 0.0
        %1915 = vmatprep.subr.mxu0 0.0
        %1916 = vmatpush2.msra.mxu0 0.0
        %1917 = vmatprep.subr.mxu0 0.0
        %1918 = vmatpush2.msra.mxu0 0.0
        %1919 = vmatprep.subr.mxu0 0.0
        %1920 = vmatpush2.msra.mxu0 0.0
        %1921 = vmatprep.subr.mxu0 0.0
        %1922 = vmatpush2.msra.mxu0 0.0
        %1923 = vmatprep.subr.mxu0 0.0
        %1924 = vmatpush2.msra.mxu0 0.0
        %1925 = vmatprep.mubr.f32.mxu0 0.0
        %1926 = vmatmul.mubr.f32.gmra.mxu0 %v1494
        %v1927 = vpop.f32.mrf.mxu0
        %v1928 = vadd.f32 %v1476, %v1927
        %v1929 = vpop.f32.mrf.mxu0
        %v1930 = vadd.f32 %v1476, %v1929
        %1931 = vmatprep.mubr.f32.mxu0 0.0
        %1932 = vmatmul.mubr.f32.gmra.mxu0 %v1497
        %v1933 = vpop.f32.mrf.mxu0
        %v1934 = vadd.f32 %v1481, %v1933
        %v1935 = vpop.f32.mrf.mxu0
        %v1936 = vadd.f32 %v1481, %v1935
        %1937 = vmatprep.mubr.f32.mxu0 0.0
        %1938 = vmatmul.mubr.f32.gmra.mxu0 %v1500
        %v1939 = vpop.f32.mrf.mxu0
        %v1940 = vadd.f32 %v1486, %v1939
        %v1941 = vpop.f32.mrf.mxu0
        %v1942 = vadd.f32 %v1486, %v1941
        %1943 = vmatprep.mubr.f32.mxu0 0.0
        %1944 = vmatmul.mubr.f32.gmra.mxu0 %v1503
        %v1945 = vpop.f32.mrf.mxu0
        %v1946 = vadd.f32 %v1491, %v1945
        %v1947 = vpop.f32.mrf.mxu0
        %v1948 = vadd.f32 %v1491, %v1947
        %1949 = vdwg.mxu0
        %v1950 = vtanh.pop %v1572
        %v1951 = vtanh.pop %v1574
        %v1952 = vtanh.pop %v1661
        %v1953 = vtanh.pop %v1663
        %v1954 = vtanh.pop %v1750
        %v1955 = vtanh.pop %v1752
        %v1956 = vtanh.pop %v1839
        %v1957 = vtanh.pop %v1841
        %v1958 = vtanh.pop %v1928
        %v1959 = vtanh.pop %v1930
        %v1960 = vtanh.pop %v1578
        %v1961 = vtanh.pop %v1580
        %v1962 = vtanh.pop %v1667
        %v1963 = vtanh.pop %v1669
        %v1964 = vtanh.pop %v1756
        %v1965 = vtanh.pop %v1758
        %v1966 = vtanh.pop %v1845
        %v1967 = vtanh.pop %v1847
        %v1968 = vtanh.pop %v1934
        %v1969 = vtanh.pop %v1936
        %v1970 = vtanh.pop %v1584
        %v1971 = vtanh.pop %v1586
        %v1972 = vtanh.pop %v1673
        %v1973 = vtanh.pop %v1675
        %v1974 = vtanh.pop %v1762
        %v1975 = vtanh.pop %v1764
        %v1976 = vtanh.pop %v1851
        %v1977 = vtanh.pop %v1853
        %v1978 = vtanh.pop %v1940
        %v1979 = vtanh.pop %v1942
        %v1980 = vtanh.pop %v1590
        %v1981 = vtanh.pop %v1592
        %v1982 = vtanh.pop %v1679
        %v1983 = vtanh.pop %v1681
        %v1984 = vtanh.pop %v1768
        %v1985 = vtanh.pop %v1770
        %v1986 = vtanh.pop %v1857
        %v1987 = vtanh.pop %v1859
        %v1988 = vtanh.pop %v1946
        %v1989 = vtanh.pop %v1948
        %v1990 = vld [vmem:[%s5] sm:$0x1]
        %v1991 = vld [vmem:[#allocation2] sm:$0x1]
        %1993 = vset.pattern.permute.xlu0 0
        %1994 = vperm.xlu0 %1993, %v1991
        %v1995 = vpop.permute.xlu0 %1994
        %v1997 = vlaneseq
        %v1998 = vshrl.u32 %v1997, 7
        %v1999 = vsub.s32 0, %v1998
        %v2000 = vrot.slane %v1995, %v1999
        %v2002 = vsel %vm965, %v1990, 0
        %2004 = vmatprep.subr.mxu0 0.0
        %2005 = vmatpush1.msra.mxu0 0.0
        %2006 = vmatprep.subr.mxu0 0.0
        %2007 = vmatpush1.msra.mxu0 0.0
        %2008 = vmatprep.subr.mxu0 0.0
        %2009 = vmatpush1.msra.mxu0 0.0
        %2010 = vmatprep.subr.mxu0 0.0
        %2011 = vmatpush1.msra.mxu0 0.0
        %2012 = vmatprep.subr.mxu0 0.0
        %2013 = vmatpush1.msra.mxu0 0.0
        %2014 = vmatprep.subr.mxu0 0.0
        %2015 = vmatpush1.msra.mxu0 0.0
        %2016 = vmatprep.subr.mxu0 0.0
        %2017 = vmatpush1.msra.mxu0 0.0
        %2018 = vmatprep.subr.mxu0 0.0
        %2019 = vmatpush1.msra.mxu0 0.0
        %2020 = vmatprep.subr.mxu0 0.0
        %2021 = vmatpush1.msra.mxu0 0.0
        %2022 = vmatprep.subr.mxu0 0.0
        %2023 = vmatpush1.msra.mxu0 0.0
        %2024 = vmatprep.subr.mxu0 0.0
        %2025 = vmatpush1.msra.mxu0 0.0
        %2026 = vmatprep.subr.mxu0 0.0
        %2027 = vmatpush1.msra.mxu0 0.0
        %2028 = vmatprep.subr.mxu0 %v1981
        %2029 = vmatpush1.msra.mxu0 %v1980
        %2030 = vmatprep.subr.mxu0 %v1971
        %2031 = vmatpush1.msra.mxu0 %v1970
        %2032 = vmatprep.subr.mxu0 %v1961
        %2033 = vmatpush1.msra.mxu0 %v1960
        %2034 = vmatprep.subr.mxu0 %v1951
        %2035 = vmatpush1.msra.mxu0 %v1950
        %2036 = vmatprep.subr.mxu0 0.0
        %2037 = vmatpush2.msra.mxu0 0.0
        %2038 = vmatprep.subr.mxu0 0.0
        %2039 = vmatpush2.msra.mxu0 0.0
        %2040 = vmatprep.subr.mxu0 0.0
        %2041 = vmatpush2.msra.mxu0 0.0
        %2042 = vmatprep.subr.mxu0 0.0
        %2043 = vmatpush2.msra.mxu0 0.0
        %2044 = vmatprep.subr.mxu0 0.0
        %2045 = vmatpush2.msra.mxu0 0.0
        %2046 = vmatprep.subr.mxu0 0.0
        %2047 = vmatpush2.msra.mxu0 0.0
        %2048 = vmatprep.subr.mxu0 0.0
        %2049 = vmatpush2.msra.mxu0 0.0
        %2050 = vmatprep.subr.mxu0 0.0
        %2051 = vmatpush2.msra.mxu0 0.0
        %2052 = vmatprep.subr.mxu0 0.0
        %2053 = vmatpush2.msra.mxu0 0.0
        %2054 = vmatprep.subr.mxu0 0.0
        %2055 = vmatpush2.msra.mxu0 0.0
        %2056 = vmatprep.subr.mxu0 0.0
        %2057 = vmatpush2.msra.mxu0 0.0
        %2058 = vmatprep.subr.mxu0 0.0
        %2059 = vmatpush2.msra.mxu0 0.0
        %2060 = vmatprep.subr.mxu0 0.0
        %2061 = vmatpush2.msra.mxu0 0.0
        %2062 = vmatprep.subr.mxu0 0.0
        %2063 = vmatpush2.msra.mxu0 0.0
        %2064 = vmatprep.subr.mxu0 0.0
        %2065 = vmatpush2.msra.mxu0 0.0
        %2066 = vmatprep.subr.mxu0 0.0
        %2067 = vmatpush2.msra.mxu0 0.0
        %2068 = vmatprep.mubr.f32.mxu0 0.0
        %2069 = vmatmul.mubr.f32.gmra.mxu0 %v2002
        %v2070 = vpop.f32.mrf.mxu0
        %v2071 = vadd.f32 %v2000, %v2070
        %v2072 = vpop.f32.mrf.mxu0
        %v2073 = vadd.f32 %v2000, %v2072
        %2074 = vdwg.mxu0
        %2075 = vmatprep.subr.mxu0 0.0
        %2076 = vmatpush1.msra.mxu0 0.0
        %2077 = vmatprep.subr.mxu0 0.0
        %2078 = vmatpush1.msra.mxu0 0.0
        %2079 = vmatprep.subr.mxu0 0.0
        %2080 = vmatpush1.msra.mxu0 0.0
        %2081 = vmatprep.subr.mxu0 0.0
        %2082 = vmatpush1.msra.mxu0 0.0
        %2083 = vmatprep.subr.mxu0 0.0
        %2084 = vmatpush1.msra.mxu0 0.0
        %2085 = vmatprep.subr.mxu0 0.0
        %2086 = vmatpush1.msra.mxu0 0.0
        %2087 = vmatprep.subr.mxu0 0.0
        %2088 = vmatpush1.msra.mxu0 0.0
        %2089 = vmatprep.subr.mxu0 0.0
        %2090 = vmatpush1.msra.mxu0 0.0
        %2091 = vmatprep.subr.mxu0 0.0
        %2092 = vmatpush1.msra.mxu0 0.0
        %2093 = vmatprep.subr.mxu0 0.0
        %2094 = vmatpush1.msra.mxu0 0.0
        %2095 = vmatprep.subr.mxu0 0.0
        %2096 = vmatpush1.msra.mxu0 0.0
        %2097 = vmatprep.subr.mxu0 0.0
        %2098 = vmatpush1.msra.mxu0 0.0
        %2099 = vmatprep.subr.mxu0 %v1983
        %2100 = vmatpush1.msra.mxu0 %v1982
        %2101 = vmatprep.subr.mxu0 %v1973
        %2102 = vmatpush1.msra.mxu0 %v1972
        %2103 = vmatprep.subr.mxu0 %v1963
        %2104 = vmatpush1.msra.mxu0 %v1962
        %2105 = vmatprep.subr.mxu0 %v1953
        %2106 = vmatpush1.msra.mxu0 %v1952
        %2107 = vmatprep.subr.mxu0 0.0
        %2108 = vmatpush2.msra.mxu0 0.0
        %2109 = vmatprep.subr.mxu0 0.0
        %2110 = vmatpush2.msra.mxu0 0.0
        %2111 = vmatprep.subr.mxu0 0.0
        %2112 = vmatpush2.msra.mxu0 0.0
        %2113 = vmatprep.subr.mxu0 0.0
        %2114 = vmatpush2.msra.mxu0 0.0
        %2115 = vmatprep.subr.mxu0 0.0
        %2116 = vmatpush2.msra.mxu0 0.0
        %2117 = vmatprep.subr.mxu0 0.0
        %2118 = vmatpush2.msra.mxu0 0.0
        %2119 = vmatprep.subr.mxu0 0.0
        %2120 = vmatpush2.msra.mxu0 0.0
        %2121 = vmatprep.subr.mxu0 0.0
        %2122 = vmatpush2.msra.mxu0 0.0
        %2123 = vmatprep.subr.mxu0 0.0
        %2124 = vmatpush2.msra.mxu0 0.0
        %2125 = vmatprep.subr.mxu0 0.0
        %2126 = vmatpush2.msra.mxu0 0.0
        %2127 = vmatprep.subr.mxu0 0.0
        %2128 = vmatpush2.msra.mxu0 0.0
        %2129 = vmatprep.subr.mxu0 0.0
        %2130 = vmatpush2.msra.mxu0 0.0
        %2131 = vmatprep.subr.mxu0 0.0
        %2132 = vmatpush2.msra.mxu0 0.0
        %2133 = vmatprep.subr.mxu0 0.0
        %2134 = vmatpush2.msra.mxu0 0.0
        %2135 = vmatprep.subr.mxu0 0.0
        %2136 = vmatpush2.msra.mxu0 0.0
        %2137 = vmatprep.subr.mxu0 0.0
        %2138 = vmatpush2.msra.mxu0 0.0
        %2139 = vmatprep.mubr.f32.mxu0 0.0
        %2140 = vmatmul.mubr.f32.gmra.mxu0 %v2002
        %v2141 = vpop.f32.mrf.mxu0
        %v2142 = vadd.f32 %v2000, %v2141
        %v2143 = vpop.f32.mrf.mxu0
        %v2144 = vadd.f32 %v2000, %v2143
        %2145 = vdwg.mxu0
        %2146 = vmatprep.subr.mxu0 0.0
        %2147 = vmatpush1.msra.mxu0 0.0
        %2148 = vmatprep.subr.mxu0 0.0
        %2149 = vmatpush1.msra.mxu0 0.0
        %2150 = vmatprep.subr.mxu0 0.0
        %2151 = vmatpush1.msra.mxu0 0.0
        %2152 = vmatprep.subr.mxu0 0.0
        %2153 = vmatpush1.msra.mxu0 0.0
        %2154 = vmatprep.subr.mxu0 0.0
        %2155 = vmatpush1.msra.mxu0 0.0
        %2156 = vmatprep.subr.mxu0 0.0
        %2157 = vmatpush1.msra.mxu0 0.0
        %2158 = vmatprep.subr.mxu0 0.0
        %2159 = vmatpush1.msra.mxu0 0.0
        %2160 = vmatprep.subr.mxu0 0.0
        %2161 = vmatpush1.msra.mxu0 0.0
        %2162 = vmatprep.subr.mxu0 0.0
        %2163 = vmatpush1.msra.mxu0 0.0
        %2164 = vmatprep.subr.mxu0 0.0
        %2165 = vmatpush1.msra.mxu0 0.0
        %2166 = vmatprep.subr.mxu0 0.0
        %2167 = vmatpush1.msra.mxu0 0.0
        %2168 = vmatprep.subr.mxu0 0.0
        %2169 = vmatpush1.msra.mxu0 0.0
        %2170 = vmatprep.subr.mxu0 %v1985
        %2171 = vmatpush1.msra.mxu0 %v1984
        %2172 = vmatprep.subr.mxu0 %v1975
        %2173 = vmatpush1.msra.mxu0 %v1974
        %2174 = vmatprep.subr.mxu0 %v1965
        %2175 = vmatpush1.msra.mxu0 %v1964
        %2176 = vmatprep.subr.mxu0 %v1955
        %2177 = vmatpush1.msra.mxu0 %v1954
        %2178 = vmatprep.subr.mxu0 0.0
        %2179 = vmatpush2.msra.mxu0 0.0
        %2180 = vmatprep.subr.mxu0 0.0
        %2181 = vmatpush2.msra.mxu0 0.0
        %2182 = vmatprep.subr.mxu0 0.0
        %2183 = vmatpush2.msra.mxu0 0.0
        %2184 = vmatprep.subr.mxu0 0.0
        %2185 = vmatpush2.msra.mxu0 0.0
        %2186 = vmatprep.subr.mxu0 0.0
        %2187 = vmatpush2.msra.mxu0 0.0
        %2188 = vmatprep.subr.mxu0 0.0
        %2189 = vmatpush2.msra.mxu0 0.0
        %2190 = vmatprep.subr.mxu0 0.0
        %2191 = vmatpush2.msra.mxu0 0.0
        %2192 = vmatprep.subr.mxu0 0.0
        %2193 = vmatpush2.msra.mxu0 0.0
        %2194 = vmatprep.subr.mxu0 0.0
        %2195 = vmatpush2.msra.mxu0 0.0
        %2196 = vmatprep.subr.mxu0 0.0
        %2197 = vmatpush2.msra.mxu0 0.0
        %2198 = vmatprep.subr.mxu0 0.0
        %2199 = vmatpush2.msra.mxu0 0.0
        %2200 = vmatprep.subr.mxu0 0.0
        %2201 = vmatpush2.msra.mxu0 0.0
        %2202 = vmatprep.subr.mxu0 0.0
        %2203 = vmatpush2.msra.mxu0 0.0
        %2204 = vmatprep.subr.mxu0 0.0
        %2205 = vmatpush2.msra.mxu0 0.0
        %2206 = vmatprep.subr.mxu0 0.0
        %2207 = vmatpush2.msra.mxu0 0.0
        %2208 = vmatprep.subr.mxu0 0.0
        %2209 = vmatpush2.msra.mxu0 0.0
        %2210 = vmatprep.mubr.f32.mxu0 0.0
        %2211 = vmatmul.mubr.f32.gmra.mxu0 %v2002
        %v2212 = vpop.f32.mrf.mxu0
        %v2213 = vadd.f32 %v2000, %v2212
        %v2214 = vpop.f32.mrf.mxu0
        %v2215 = vadd.f32 %v2000, %v2214
        %2216 = vdwg.mxu0
        %2217 = vmatprep.subr.mxu0 0.0
        %2218 = vmatpush1.msra.mxu0 0.0
        %2219 = vmatprep.subr.mxu0 0.0
        %2220 = vmatpush1.msra.mxu0 0.0
        %2221 = vmatprep.subr.mxu0 0.0
        %2222 = vmatpush1.msra.mxu0 0.0
        %2223 = vmatprep.subr.mxu0 0.0
        %2224 = vmatpush1.msra.mxu0 0.0
        %2225 = vmatprep.subr.mxu0 0.0
        %2226 = vmatpush1.msra.mxu0 0.0
        %2227 = vmatprep.subr.mxu0 0.0
        %2228 = vmatpush1.msra.mxu0 0.0
        %2229 = vmatprep.subr.mxu0 0.0
        %2230 = vmatpush1.msra.mxu0 0.0
        %2231 = vmatprep.subr.mxu0 0.0
        %2232 = vmatpush1.msra.mxu0 0.0
        %2233 = vmatprep.subr.mxu0 0.0
        %2234 = vmatpush1.msra.mxu0 0.0
        %2235 = vmatprep.subr.mxu0 0.0
        %2236 = vmatpush1.msra.mxu0 0.0
        %2237 = vmatprep.subr.mxu0 0.0
        %2238 = vmatpush1.msra.mxu0 0.0
        %2239 = vmatprep.subr.mxu0 0.0
        %2240 = vmatpush1.msra.mxu0 0.0
        %2241 = vmatprep.subr.mxu0 %v1987
        %2242 = vmatpush1.msra.mxu0 %v1986
        %2243 = vmatprep.subr.mxu0 %v1977
        %2244 = vmatpush1.msra.mxu0 %v1976
        %2245 = vmatprep.subr.mxu0 %v1967
        %2246 = vmatpush1.msra.mxu0 %v1966
        %2247 = vmatprep.subr.mxu0 %v1957
        %2248 = vmatpush1.msra.mxu0 %v1956
        %2249 = vmatprep.subr.mxu0 0.0
        %2250 = vmatpush2.msra.mxu0 0.0
        %2251 = vmatprep.subr.mxu0 0.0
        %2252 = vmatpush2.msra.mxu0 0.0
        %2253 = vmatprep.subr.mxu0 0.0
        %2254 = vmatpush2.msra.mxu0 0.0
        %2255 = vmatprep.subr.mxu0 0.0
        %2256 = vmatpush2.msra.mxu0 0.0
        %2257 = vmatprep.subr.mxu0 0.0
        %2258 = vmatpush2.msra.mxu0 0.0
        %2259 = vmatprep.subr.mxu0 0.0
        %2260 = vmatpush2.msra.mxu0 0.0
        %2261 = vmatprep.subr.mxu0 0.0
        %2262 = vmatpush2.msra.mxu0 0.0
        %2263 = vmatprep.subr.mxu0 0.0
        %2264 = vmatpush2.msra.mxu0 0.0
        %2265 = vmatprep.subr.mxu0 0.0
        %2266 = vmatpush2.msra.mxu0 0.0
        %2267 = vmatprep.subr.mxu0 0.0
        %2268 = vmatpush2.msra.mxu0 0.0
        %2269 = vmatprep.subr.mxu0 0.0
        %2270 = vmatpush2.msra.mxu0 0.0
        %2271 = vmatprep.subr.mxu0 0.0
        %2272 = vmatpush2.msra.mxu0 0.0
        %2273 = vmatprep.subr.mxu0 0.0
        %2274 = vmatpush2.msra.mxu0 0.0
        %2275 = vmatprep.subr.mxu0 0.0
        %2276 = vmatpush2.msra.mxu0 0.0
        %2277 = vmatprep.subr.mxu0 0.0
        %2278 = vmatpush2.msra.mxu0 0.0
        %2279 = vmatprep.subr.mxu0 0.0
        %2280 = vmatpush2.msra.mxu0 0.0
        %2281 = vmatprep.mubr.f32.mxu0 0.0
        %2282 = vmatmul.mubr.f32.gmra.mxu0 %v2002
        %v2283 = vpop.f32.mrf.mxu0
        %v2284 = vadd.f32 %v2000, %v2283
        %v2285 = vpop.f32.mrf.mxu0
        %v2286 = vadd.f32 %v2000, %v2285
        %2287 = vdwg.mxu0
        %2288 = vmatprep.subr.mxu0 0.0
        %2289 = vmatpush1.msra.mxu0 0.0
        %2290 = vmatprep.subr.mxu0 0.0
        %2291 = vmatpush1.msra.mxu0 0.0
        %2292 = vmatprep.subr.mxu0 0.0
        %2293 = vmatpush1.msra.mxu0 0.0
        %2294 = vmatprep.subr.mxu0 0.0
        %2295 = vmatpush1.msra.mxu0 0.0
        %2296 = vmatprep.subr.mxu0 0.0
        %2297 = vmatpush1.msra.mxu0 0.0
        %2298 = vmatprep.subr.mxu0 0.0
        %2299 = vmatpush1.msra.mxu0 0.0
        %2300 = vmatprep.subr.mxu0 0.0
        %2301 = vmatpush1.msra.mxu0 0.0
        %2302 = vmatprep.subr.mxu0 0.0
        %2303 = vmatpush1.msra.mxu0 0.0
        %2304 = vmatprep.subr.mxu0 0.0
        %2305 = vmatpush1.msra.mxu0 0.0
        %2306 = vmatprep.subr.mxu0 0.0
        %2307 = vmatpush1.msra.mxu0 0.0
        %2308 = vmatprep.subr.mxu0 0.0
        %2309 = vmatpush1.msra.mxu0 0.0
        %2310 = vmatprep.subr.mxu0 0.0
        %2311 = vmatpush1.msra.mxu0 0.0
        %2312 = vmatprep.subr.mxu0 %v1989
        %2313 = vmatpush1.msra.mxu0 %v1988
        %2314 = vmatprep.subr.mxu0 %v1979
        %2315 = vmatpush1.msra.mxu0 %v1978
        %2316 = vmatprep.subr.mxu0 %v1969
        %2317 = vmatpush1.msra.mxu0 %v1968
        %2318 = vmatprep.subr.mxu0 %v1959
        %2319 = vmatpush1.msra.mxu0 %v1958
        %2320 = vmatprep.subr.mxu0 0.0
        %2321 = vmatpush2.msra.mxu0 0.0
        %2322 = vmatprep.subr.mxu0 0.0
        %2323 = vmatpush2.msra.mxu0 0.0
        %2324 = vmatprep.subr.mxu0 0.0
        %2325 = vmatpush2.msra.mxu0 0.0
        %2326 = vmatprep.subr.mxu0 0.0
        %2327 = vmatpush2.msra.mxu0 0.0
        %2328 = vmatprep.subr.mxu0 0.0
        %2329 = vmatpush2.msra.mxu0 0.0
        %2330 = vmatprep.subr.mxu0 0.0
        %2331 = vmatpush2.msra.mxu0 0.0
        %2332 = vmatprep.subr.mxu0 0.0
        %2333 = vmatpush2.msra.mxu0 0.0
        %2334 = vmatprep.subr.mxu0 0.0
        %2335 = vmatpush2.msra.mxu0 0.0
        %2336 = vmatprep.subr.mxu0 0.0
        %2337 = vmatpush2.msra.mxu0 0.0
        %2338 = vmatprep.subr.mxu0 0.0
        %2339 = vmatpush2.msra.mxu0 0.0
        %2340 = vmatprep.subr.mxu0 0.0
        %2341 = vmatpush2.msra.mxu0 0.0
        %2342 = vmatprep.subr.mxu0 0.0
        %2343 = vmatpush2.msra.mxu0 0.0
        %2344 = vmatprep.subr.mxu0 0.0
        %2345 = vmatpush2.msra.mxu0 0.0
        %2346 = vmatprep.subr.mxu0 0.0
        %2347 = vmatpush2.msra.mxu0 0.0
        %2348 = vmatprep.subr.mxu0 0.0
        %2349 = vmatpush2.msra.mxu0 0.0
        %2350 = vmatprep.subr.mxu0 0.0
        %2351 = vmatpush2.msra.mxu0 0.0
        %2352 = vmatprep.mubr.f32.mxu0 0.0
        %2353 = vmatmul.mubr.f32.gmra.mxu0 %v2002
        %v2354 = vpop.f32.mrf.mxu0
        %v2355 = vadd.f32 %v2000, %v2354
        %v2356 = vpop.f32.mrf.mxu0
        %v2357 = vadd.f32 %v2000, %v2356
        %2358 = vdwg.mxu0
        %v2369 = vcombine.low %v2071, %v2073
        %v2370 = vcombine.low %v2142, %v2144
        %v2371 = vcombine.low %v2213, %v2215
        %v2372 = vcombine.low %v2284, %v2286
        %v2374 = vunpack.c.l.s4 1966171168
        %v2375 = vunpack.c.0.s8 %v2374
        %v2376 = vlaneseq
        %v2377 = vshrl.u32 %v2376, 7
        %v2378 = vsub.s32 %v2375, %v2377
        %v2379 = vrot.slane %v2369, %v2378
        %v2381 = vunpack.c.l.s4 1966171168
        %v2382 = vunpack.c.0.s8 %v2381
        %v2383 = vlaneseq
        %v2384 = vshrl.u32 %v2383, 7
        %v2385 = vsub.s32 %v2382, %v2384
        %v2386 = vrot.slane %v2370, %v2385
        %v2388 = vunpack.c.l.s4 1966171168
        %v2389 = vunpack.c.0.s8 %v2388
        %v2390 = vlaneseq
        %v2391 = vshrl.u32 %v2390, 7
        %v2392 = vsub.s32 %v2389, %v2391
        %v2393 = vrot.slane %v2371, %v2392
        %v2395 = vunpack.c.l.s4 1966171168
        %v2396 = vunpack.c.0.s8 %v2395
        %v2397 = vlaneseq
        %v2398 = vshrl.u32 %v2397, 7
        %v2399 = vsub.s32 %v2396, %v2398
        %v2400 = vrot.slane %v2372, %v2399
        %v2401 = vcombine.low %v2379, %v2386
        %v2402 = vcombine.low %v2393, %v2400
        %v2404 = vunpack.c.l.s4 1966171168
        %v2405 = vunpack.c.0.s8 %v2404
        %v2406 = vlaneseq
        %v2407 = vshrl.u32 %v2406, 7
        %v2408 = vsub.s32 %v2405, %v2407
        %v2409 = vrot.slane %v2401, %v2408
        %v2411 = vunpack.c.l.s4 1966171168
        %v2412 = vunpack.c.0.s8 %v2411
        %v2413 = vlaneseq
        %v2414 = vshrl.u32 %v2413, 7
        %v2415 = vsub.s32 %v2412, %v2414
        %v2416 = vrot.slane %v2402, %v2415
        %v2417 = vcombine.low %v2409, %v2416
        %v2418 = vcombine.low %v2355, %v2357
        %v2420 = vunpack.c.l.s4 1966171168
        %v2421 = vunpack.c.0.s8 %v2420
        %v2422 = vlaneseq
        %v2423 = vshrl.u32 %v2422, 7
        %v2424 = vsub.s32 %v2421, %v2423
        %v2425 = vrot.slane %v2418, %v2424
        %v2427 = vunpack.c.l.s4 1966171168
        %v2428 = vunpack.c.0.s8 %v2427
        %v2429 = vlaneseq
        %v2430 = vshrl.u32 %v2429, 7
        %v2431 = vsub.s32 %v2428, %v2430
        %v2432 = vrot.slane %v2425, %v2431
        %2435 = vst [vmem:[%s289] sm:$0xff] %v2417
        %v2436 = vlaneseq
        %vm2437 = vcmp.ge.s32.totalorder %v2436, 0
        %vm2438 = vcmp.lt.s32.totalorder %v2436, 256
        %vm2439 = vmand %vm2437, %vm2438
        %2440 = vst.msk [vmem:[%s289 + $0x8] sm:$0x3] %vm2439, %v2432
        %s2441 = sand.u32 %s184, 1
        %s2442 = scalar_lea.sflag [#allocation5], %s2441
        %s2443 = sand.u32 %s184, 1
        %s2444 = smul.addr %s2443, 10
        %s2445 = scalar_lea.vmem [#allocation6], %s2444
        // Predicated region
        $region53: #{tpu_custom_call.1} parent=47 // pred_check
          %p2446 = pneg %p194
        $region54: #{tpu_custom_call.1} parent=47 // pred_check_branch
          %2448 = sbr.rel (%p2446) target = $region56
        $region55: #{tpu_custom_call.1} parent=47 // pred_region
          %s2449 = smul.u32 10, %s24
          %s2451 = ssub.s32 160, 160
          %2452 = vsyncadd %s2442, %s2451
          %s2453 = smul.addr %s2449, 16
          %s2454 = scalar_lea.hbm %s7, %s2453
          %s2456 = sshll.u32 %s2445, 4
          %s2457 = int_to_ptr.vmem [resolvable:$true] %s2456
          %2459 = dma.vmem_to_hbm [thread:$0]  %s2457, 160, %s2454, %s2442
        $region56: #{tpu_custom_call.1} parent=47 // pred_fallthru
          _
      $region48: #{tpu_custom_call.1} parent=5 // pred_fallthru
        _
      %p2460 = scmp.le.s32.totalorder 2, %s19
      // Predicated region
      $region57: #{tpu_custom_call.1} parent=5 // pred_check
        %p2461 = pneg %p2460
      $region58: #{tpu_custom_call.1} parent=5 // pred_check_branch
        %2463 = sbr.rel (%p2461) target = $region60
      $region59: #{tpu_custom_call.1} parent=5 // pred_region
        %s2464 = ssub.s32 %s19, 2
        // Predicated region
        $region61: #{tpu_custom_call.1} parent=59 // pred_check
          %p2465 = pneg %p200
        $region62: #{tpu_custom_call.1} parent=59 // pred_check_branch
          %2467 = sbr.rel (%p2465) target = $region64
        $region63: #{tpu_custom_call.1} parent=59 // pred_region
          %s2468 = sand.u32 %s185, 1
          %s2469 = scalar_lea.sflag [#allocation5], %s2468
          %s2470 = sand.u32 %s185, 1
          %s2471 = smul.addr %s2470, 10
          %s2472 = scalar_lea.vmem [#allocation6], %s2471
          %2473 = dma.done %s2469, 160
        $region64: #{tpu_custom_call.1} parent=59 // pred_fallthru
          _
      $region60: #{tpu_custom_call.1} parent=5 // pred_fallthru
        _
    $region6: #{tpu_custom_call.1} parent=1 // loop_footer
      %s23 = sadd.s32 1, %s19
    $region7: #{tpu_custom_call.1} parent=1 // loop_footer_branch
      %18 = sbr.rel target = $region3
    $region8: #{tpu_custom_call.1} parent=1 // loop_exit
      _
    %2474 = vsyncpa [#allocation4], 1
    %s2475 = scalar_lea.sflag [#allocation4], 1
    %2476 = vsyncpa %s2475, 1
    %2477 = vsyncpa [#allocation5], 1
    %s2478 = scalar_lea.sflag [#allocation5], 1
    %2479 = vsyncpa %s2478, 1

</llo_original>
